<compile_context>
chip_gen: v5e
topology: v5e:2x2
jax: 0.10.0
libtpu: 0.0.40
codegen_flags: <defaults>
</compile_context>

<pallas_src>
import math

import jax
import jax.numpy as jnp
from jax import lax
from jax.experimental import pallas as pl
from jax.experimental.pallas import tpu as pltpu


def _round_up(x, m):
    return ((x + m - 1) // m) * m


def _pad_to(a, shape, value=0.0):
    pads = [(0, s - d) for d, s in zip(a.shape, shape)]
    return jnp.pad(a, pads, mode="constant", constant_values=value)


def kws_forward_kernel(x_ref, wxr_ref, wxz_ref, wxn_ref,
                       whr_ref, whz_ref, whn_ref,
                       br_ref, bz_ref, bnx_ref, bnh_ref,
                       wout_ref, bout_ref,
                       out_ref,
                       h_ref, gxr_ref, gxz_ref, gxn_ref):
    """Grid = (batch_blocks, time_chunks).  Per invocation:

    x_ref:    (Tt, Bb, Dp)  f32   current time-chunk of the audio
    wx*_ref:  (Dp, Hp)      f32   input->gate weights (r, z, n)
    wh*_ref:  (Hp, Hp)      f32   hidden->gate weights (r, z, n)
    br/bz:    (1, Hp)       f32   folded b_ih_g + b_hh_g for r, z
    bnx/bnh:  (1, Hp)       f32   b_ih_n / b_hh_n (bnh is r-gated -> separate)
    wout:     (Hp, Kp), bout: (1, Kp)
    out_ref:  (Bb, Kp)      f32   log-probabilities (written on last chunk)
    h_ref:    (Bb, Hp)      f32   VMEM scratch, hidden state carried over chunks
    gx*_ref:  (Tt, Bb, Hp)  f32   VMEM scratch, hoisted input projections
    """
    t_idx = pl.program_id(1)
    Tt, Bb, Dp = x_ref.shape
    Hp = whr_ref.shape[0]

    @pl.when(t_idx == 0)
    def _():
        h_ref[...] = jnp.zeros_like(h_ref)   # init_hidden(): zero state

    # --- Hoisted input projection: one matmul per gate for the whole chunk.
    xm = x_ref[...].reshape(Tt * Bb, Dp)
    gxr_ref[...] = (jnp.dot(xm, wxr_ref[...], preferred_element_type=jnp.float32)
                    + br_ref[...]).reshape(Tt, Bb, Hp)
    gxz_ref[...] = (jnp.dot(xm, wxz_ref[...], preferred_element_type=jnp.float32)
                    + bz_ref[...]).reshape(Tt, Bb, Hp)
    gxn_ref[...] = (jnp.dot(xm, wxn_ref[...], preferred_element_type=jnp.float32)
                    + bnx_ref[...]).reshape(Tt, Bb, Hp)

    # Hoist the (1,Hp)->(Bb,Hp) broadcast of the n-gate hidden bias.
    bnh = jnp.broadcast_to(bnh_ref[...], (Bb, Hp))

    # --- Serial recurrence: only h @ W_hh + gate math remains per step.
    def step(i, h):
        ghr = jnp.dot(h, whr_ref[...], preferred_element_type=jnp.float32)
        ghz = jnp.dot(h, whz_ref[...], preferred_element_type=jnp.float32)
        ghn = jnp.dot(h, whn_ref[...], preferred_element_type=jnp.float32) + bnh
        r = jax.nn.sigmoid(gxr_ref[i] + ghr)
        z = jax.nn.sigmoid(gxz_ref[i] + ghz)
        n = jnp.tanh(gxn_ref[i] + r * ghn)
        return (1.0 - z) * n + z * h

    h = lax.fori_loop(0, Tt, step, h_ref[...], unroll=True)
    h_ref[...] = h

    # --- Classifier + log_softmax on the last time chunk.
    @pl.when(t_idx == pl.num_programs(1) - 1)
    def _():
        logits = jnp.dot(h, wout_ref[...],
                         preferred_element_type=jnp.float32) + bout_ref[...]
        m = jnp.max(logits, axis=-1, keepdims=True)
        lse = jnp.log(jnp.sum(jnp.exp(logits - m), axis=-1, keepdims=True)) + m
        out_ref[...] = logits - lse


def keyword_spotter_forward(x, params, *, t_chunk=4):
    """x: (T, B, D) float32 (batch_first=False) -> (B, K) float32 log-probs."""
    T, B, D = x.shape
    H = params["w_hh_r"].shape[0]
    K = params["w_out"].shape[1]
    assert T % t_chunk == 0, "t_chunk must divide the sequence length"

    # Lane/sublane padding (padded weight rows/cols are zero -> no-op math;
    # padded logits columns get a -1e30 bias so log_softmax ignores them).
    Dp = _round_up(D, 128)
    Hp = _round_up(H, 128)
    Kp = _round_up(K, 128)
    Bp = _round_up(B, 8)
    b_block = Bp if Bp <= 128 else 128
    assert Bp % b_block == 0

    x_p = _pad_to(x.astype(jnp.float32), (T, Bp, Dp))
    wxr = _pad_to(params["w_ih_r"], (Dp, Hp))
    wxz = _pad_to(params["w_ih_z"], (Dp, Hp))
    wxn = _pad_to(params["w_ih_n"], (Dp, Hp))
    whr = _pad_to(params["w_hh_r"], (Hp, Hp))
    whz = _pad_to(params["w_hh_z"], (Hp, Hp))
    whn = _pad_to(params["w_hh_n"], (Hp, Hp))
    br = _pad_to(params["b_ih_r"] + params["b_hh_r"], (1, Hp))   # folded
    bz = _pad_to(params["b_ih_z"] + params["b_hh_z"], (1, Hp))   # folded
    bnx = _pad_to(params["b_ih_n"], (1, Hp))
    bnh = _pad_to(params["b_hh_n"], (1, Hp))
    wout = _pad_to(params["w_out"], (Hp, Kp))
    bout = _pad_to(params["b_out"], (1, Kp), value=-1e30)

    grid = (Bp // b_block, T // t_chunk)
    const = lambda b, t: (0, 0)   # weights/biases: resident single block

    out_p = pl.pallas_call(
        kws_forward_kernel,
        out_shape=jax.ShapeDtypeStruct((Bp, Kp), jnp.float32),
        grid_spec=pltpu.PrefetchScalarGridSpec(
            num_scalar_prefetch=0,
            grid=grid,
            in_specs=[
                pl.BlockSpec((t_chunk, b_block, Dp), lambda b, t: (t, b, 0)),
                pl.BlockSpec((Dp, Hp), const),
                pl.BlockSpec((Dp, Hp), const),
                pl.BlockSpec((Dp, Hp), const),
                pl.BlockSpec((Hp, Hp), const),
                pl.BlockSpec((Hp, Hp), const),
                pl.BlockSpec((Hp, Hp), const),
                pl.BlockSpec((1, Hp), const),
                pl.BlockSpec((1, Hp), const),
                pl.BlockSpec((1, Hp), const),
                pl.BlockSpec((1, Hp), const),
                pl.BlockSpec((Hp, Kp), const),
                pl.BlockSpec((1, Kp), const),
            ],
            out_specs=pl.BlockSpec((b_block, Kp), lambda b, t: (b, 0)),
            scratch_shapes=[
                pltpu.VMEM((b_block, Hp), jnp.float32),            # h carry
                pltpu.VMEM((t_chunk, b_block, Hp), jnp.float32),   # gx_r
                pltpu.VMEM((t_chunk, b_block, Hp), jnp.float32),   # gx_z
                pltpu.VMEM((t_chunk, b_block, Hp), jnp.float32),   # gx_n
            ],
        ),
        compiler_params=pltpu.CompilerParams(
            # batch blocks are independent -> megacore-parallel on v7x;
            # the time axis carries the recurrence -> arbitrary (sequential).
            dimension_semantics=("parallel", "arbitrary"),
            # NOTE: at real audio sizes set vmem_limit_bytes here (defaults:
            # 16 MiB v5e, 32 MiB v6e/v7x scoped) and shrink t_chunk for v7x.
        ),
    )(x_p, wxr, wxz, wxn, whr, whz, whn, br, bz, bnx, bnh, wout, bout)

    return out_p[:B, :K]


def init_params(key, input_dim, hidden, num_keywords):
    """Deterministic PyTorch-style uniform(-1/sqrt(H), 1/sqrt(H)) init, per gate."""
    ks = jax.random.split(key, 14)
    bound = 1.0 / math.sqrt(hidden)

    def u(k, shape):
        return jax.random.uniform(k, shape, jnp.float32, -bound, bound)

    return {
        "w_ih_r": u(ks[0], (input_dim, hidden)),
        "w_ih_z": u(ks[1], (input_dim, hidden)),
        "w_ih_n": u(ks[2], (input_dim, hidden)),
        "w_hh_r": u(ks[3], (hidden, hidden)),
        "w_hh_z": u(ks[4], (hidden, hidden)),
        "w_hh_n": u(ks[5], (hidden, hidden)),
        "b_ih_r": u(ks[6], (1, hidden)),
        "b_ih_z": u(ks[7], (1, hidden)),
        "b_ih_n": u(ks[8], (1, hidden)),
        "b_hh_r": u(ks[9], (1, hidden)),
        "b_hh_z": u(ks[10], (1, hidden)),
        "b_hh_n": u(ks[11], (1, hidden)),
        "w_out": u(ks[12], (hidden, num_keywords)),
        "b_out": u(ks[13], (1, num_keywords)),
    }


def reference_forward(x, p):
    """Pure-JAX reference (PyTorch GRU semantics) for correctness checking."""
    T, B, D = x.shape
    H = p["w_hh_r"].shape[0]
    h = jnp.zeros((B, H), jnp.float32)
    for t in range(T):
        gr = x[t] @ p["w_ih_r"] + p["b_ih_r"] + h @ p["w_hh_r"] + p["b_hh_r"]
        gz = x[t] @ p["w_ih_z"] + p["b_ih_z"] + h @ p["w_hh_z"] + p["b_hh_z"]
        r = jax.nn.sigmoid(gr)
        z = jax.nn.sigmoid(gz)
        n = jnp.tanh(x[t] @ p["w_ih_n"] + p["b_ih_n"]
                     + r * (h @ p["w_hh_n"] + p["b_hh_n"]))
        h = (1.0 - z) * n + z * h
    logits = h @ p["w_out"] + p["b_out"]
    return jax.nn.log_softmax(logits, axis=-1)


if __name__ == "__main__":
    T, B, D = 8, 2, 32          # seq_len, batch, input_dim
    H, K = 32, 8                # hidden units, num_keywords

    key = jax.random.PRNGKey(0)
    k_x, k_p = jax.random.split(key)
    x = jax.random.normal(k_x, (T, B, D), dtype=jnp.float32)
    params = init_params(k_p, D, H, K)

    out = keyword_spotter_forward(x, params, t_chunk=4)
    out = jax.block_until_ready(out)

    ref = reference_forward(x, params)
    assert out.shape == (B, K)
    assert jnp.allclose(out, ref, atol=2e-5, rtol=2e-5), "mismatch vs reference"

    print("KERNEL_OK")
</pallas_src>

<mosaic_0001>
module attributes {stable_mosaic.version = 11 : i64} {
  func.func @kws_forward_kernel(%arg0: i32, %arg1: i32, %arg2: memref<4x8x128xf32, #tpu.memory_space<vmem>>, %arg3: memref<128x128xf32, #tpu.memory_space<vmem>>, %arg4: memref<128x128xf32, #tpu.memory_space<vmem>>, %arg5: memref<128x128xf32, #tpu.memory_space<vmem>>, %arg6: memref<128x128xf32, #tpu.memory_space<vmem>>, %arg7: memref<128x128xf32, #tpu.memory_space<vmem>>, %arg8: memref<128x128xf32, #tpu.memory_space<vmem>>, %arg9: memref<1x128xf32, #tpu.memory_space<vmem>>, %arg10: memref<1x128xf32, #tpu.memory_space<vmem>>, %arg11: memref<1x128xf32, #tpu.memory_space<vmem>>, %arg12: memref<1x128xf32, #tpu.memory_space<vmem>>, %arg13: memref<128x128xf32, #tpu.memory_space<vmem>>, %arg14: memref<1x128xf32, #tpu.memory_space<vmem>>, %arg15: memref<8x128xf32, #tpu.memory_space<vmem>>, %arg16: memref<8x128xf32, #tpu.memory_space<vmem>>, %arg17: memref<4x8x128xf32, #tpu.memory_space<vmem>>, %arg18: memref<4x8x128xf32, #tpu.memory_space<vmem>>, %arg19: memref<4x8x128xf32, #tpu.memory_space<vmem>>) attributes {dimension_semantics = [#tpu.dimension_semantics<parallel>, #tpu.dimension_semantics<arbitrary>], iteration_bounds = array<i64: 1, 2>, scalar_prefetch = 0 : i64, scratch_operands = 4 : i64, tpu.core_type = #tpu.core_type<tc>, window_params = [{transform_indices = @transform_0, window_bounds = array<i64: 4, 8, 128>}, {pipeline_mode = #tpu.pipeline_mode<synchronous>, transform_indices = @transform_1, window_bounds = array<i64: 128, 128>}, {pipeline_mode = #tpu.pipeline_mode<synchronous>, transform_indices = @transform_2, window_bounds = array<i64: 128, 128>}, {pipeline_mode = #tpu.pipeline_mode<synchronous>, transform_indices = @transform_3, window_bounds = array<i64: 128, 128>}, {pipeline_mode = #tpu.pipeline_mode<synchronous>, transform_indices = @transform_4, window_bounds = array<i64: 128, 128>}, {pipeline_mode = #tpu.pipeline_mode<synchronous>, transform_indices = @transform_5, window_bounds = array<i64: 128, 128>}, {pipeline_mode = #tpu.pipeline_mode<synchronous>, transform_indices = @transform_6, window_bounds = array<i64: 128, 128>}, {pipeline_mode = #tpu.pipeline_mode<synchronous>, transform_indices = @transform_7, window_bounds = array<i64: 1, 128>}, {pipeline_mode = #tpu.pipeline_mode<synchronous>, transform_indices = @transform_8, window_bounds = array<i64: 1, 128>}, {pipeline_mode = #tpu.pipeline_mode<synchronous>, transform_indices = @transform_9, window_bounds = array<i64: 1, 128>}, {pipeline_mode = #tpu.pipeline_mode<synchronous>, transform_indices = @transform_10, window_bounds = array<i64: 1, 128>}, {pipeline_mode = #tpu.pipeline_mode<synchronous>, transform_indices = @transform_11, window_bounds = array<i64: 128, 128>}, {pipeline_mode = #tpu.pipeline_mode<synchronous>, transform_indices = @transform_12, window_bounds = array<i64: 1, 128>}, {transform_indices = @transform_13, window_bounds = array<i64: 8, 128>}]} {
    %c0_i32 = arith.constant 0 : i32
    %0 = arith.cmpi eq, %arg1, %c0_i32 : i32
    %1 = arith.extui %0 : i1 to i32
    %c0_i32_0 = arith.constant 0 : i32
    %2 = arith.cmpi ne, %1, %c0_i32_0 : i32
    scf.if %2 {
      %cst_107 = arith.constant 0.000000e+00 : f32
      %178 = vector.broadcast %cst_107 : f32 to vector<8x128xf32>
      %c0_108 = arith.constant 0 : index
      %c0_109 = arith.constant 0 : index
      %179 = vector.load %arg16[%c0_108, %c0_109] : memref<8x128xf32, #tpu.memory_space<vmem>>, vector<8x128xf32>
      tpu.vector_store %arg16[%c0_108, %c0_109], %178 {strides = array<i32>} : memref<8x128xf32, #tpu.memory_space<vmem>>, vector<8x128xf32>,
    } else {
    }
    %c0 = arith.constant 0 : index
    %c0_1 = arith.constant 0 : index
    %c0_2 = arith.constant 0 : index
    %3 = vector.load %arg2[%c0, %c0_1, %c0_2] : memref<4x8x128xf32, #tpu.memory_space<vmem>>, vector<4x8x128xf32>
    %4 = vector.shape_cast %3 : vector<4x8x128xf32> to vector<32x128xf32>
    %c0_3 = arith.constant 0 : index
    %c0_4 = arith.constant 0 : index
    %5 = vector.load %arg3[%c0_3, %c0_4] : memref<128x128xf32, #tpu.memory_space<vmem>>, vector<128x128xf32>
    %cst = arith.constant dense<0.000000e+00> : vector<32x128xf32>
    %6 = tpu.matmul %4, %5, %cst {dimension_numbers = #tpu.dot_dimension_numbers<[1], [0], [0], [1], [0, 0, 1, 1], [], []>} : vector<32x128xf32>, vector<128x128xf32>, vector<32x128xf32> -> vector<32x128xf32>
    %c0_5 = arith.constant 0 : index
    %c0_6 = arith.constant 0 : index
    %7 = vector.load %arg9[%c0_5, %c0_6] : memref<1x128xf32, #tpu.memory_space<vmem>>, vector<1x128xf32>
    %8 = vector.broadcast %7 : vector<1x128xf32> to vector<32x128xf32>
    %9 = arith.addf %6, %8 : vector<32x128xf32>
    %10 = vector.shape_cast %9 : vector<32x128xf32> to vector<4x8x128xf32>
    %c0_7 = arith.constant 0 : index
    %c0_8 = arith.constant 0 : index
    %c0_9 = arith.constant 0 : index
    %11 = vector.load %arg17[%c0_7, %c0_8, %c0_9] : memref<4x8x128xf32, #tpu.memory_space<vmem>>, vector<4x8x128xf32>
    tpu.vector_store %arg17[%c0_7, %c0_8, %c0_9], %10 {strides = array<i32>} : memref<4x8x128xf32, #tpu.memory_space<vmem>>, vector<4x8x128xf32>,
    %c0_10 = arith.constant 0 : index
    %c0_11 = arith.constant 0 : index
    %12 = vector.load %arg4[%c0_10, %c0_11] : memref<128x128xf32, #tpu.memory_space<vmem>>, vector<128x128xf32>
    %cst_12 = arith.constant dense<0.000000e+00> : vector<32x128xf32>
    %13 = tpu.matmul %4, %12, %cst_12 {dimension_numbers = #tpu.dot_dimension_numbers<[1], [0], [0], [1], [0, 0, 1, 1], [], []>} : vector<32x128xf32>, vector<128x128xf32>, vector<32x128xf32> -> vector<32x128xf32>
    %c0_13 = arith.constant 0 : index
    %c0_14 = arith.constant 0 : index
    %14 = vector.load %arg10[%c0_13, %c0_14] : memref<1x128xf32, #tpu.memory_space<vmem>>, vector<1x128xf32>
    %15 = vector.broadcast %14 : vector<1x128xf32> to vector<32x128xf32>
    %16 = arith.addf %13, %15 : vector<32x128xf32>
    %17 = vector.shape_cast %16 : vector<32x128xf32> to vector<4x8x128xf32>
    %c0_15 = arith.constant 0 : index
    %c0_16 = arith.constant 0 : index
    %c0_17 = arith.constant 0 : index
    %18 = vector.load %arg18[%c0_15, %c0_16, %c0_17] : memref<4x8x128xf32, #tpu.memory_space<vmem>>, vector<4x8x128xf32>
    tpu.vector_store %arg18[%c0_15, %c0_16, %c0_17], %17 {strides = array<i32>} : memref<4x8x128xf32, #tpu.memory_space<vmem>>, vector<4x8x128xf32>,
    %c0_18 = arith.constant 0 : index
    %c0_19 = arith.constant 0 : index
    %19 = vector.load %arg5[%c0_18, %c0_19] : memref<128x128xf32, #tpu.memory_space<vmem>>, vector<128x128xf32>
    %cst_20 = arith.constant dense<0.000000e+00> : vector<32x128xf32>
    %20 = tpu.matmul %4, %19, %cst_20 {dimension_numbers = #tpu.dot_dimension_numbers<[1], [0], [0], [1], [0, 0, 1, 1], [], []>} : vector<32x128xf32>, vector<128x128xf32>, vector<32x128xf32> -> vector<32x128xf32>
    %c0_21 = arith.constant 0 : index
    %c0_22 = arith.constant 0 : index
    %21 = vector.load %arg11[%c0_21, %c0_22] : memref<1x128xf32, #tpu.memory_space<vmem>>, vector<1x128xf32>
    %22 = vector.broadcast %21 : vector<1x128xf32> to vector<32x128xf32>
    %23 = arith.addf %20, %22 : vector<32x128xf32>
    %24 = vector.shape_cast %23 : vector<32x128xf32> to vector<4x8x128xf32>
    %c0_23 = arith.constant 0 : index
    %c0_24 = arith.constant 0 : index
    %c0_25 = arith.constant 0 : index
    %25 = vector.load %arg19[%c0_23, %c0_24, %c0_25] : memref<4x8x128xf32, #tpu.memory_space<vmem>>, vector<4x8x128xf32>
    tpu.vector_store %arg19[%c0_23, %c0_24, %c0_25], %24 {strides = array<i32>} : memref<4x8x128xf32, #tpu.memory_space<vmem>>, vector<4x8x128xf32>,
    %c0_26 = arith.constant 0 : index
    %c0_27 = arith.constant 0 : index
    %26 = vector.load %arg12[%c0_26, %c0_27] : memref<1x128xf32, #tpu.memory_space<vmem>>, vector<1x128xf32>
    %27 = vector.shape_cast %26 : vector<1x128xf32> to vector<1x128xf32>
    %28 = vector.broadcast %27 : vector<1x128xf32> to vector<8x128xf32>
    %c0_28 = arith.constant 0 : index
    %c0_29 = arith.constant 0 : index
    %29 = vector.load %arg16[%c0_28, %c0_29] : memref<8x128xf32, #tpu.memory_space<vmem>>, vector<8x128xf32>
    %c0_i32_30 = arith.constant 0 : i32
    %c0_31 = arith.constant 0 : index
    %c0_32 = arith.constant 0 : index
    %30 = vector.load %arg6[%c0_31, %c0_32] : memref<128x128xf32, #tpu.memory_space<vmem>>, vector<128x128xf32>
    %cst_33 = arith.constant dense<0.000000e+00> : vector<8x128xf32>
    %31 = tpu.matmul %29, %30, %cst_33 {dimension_numbers = #tpu.dot_dimension_numbers<[1], [0], [0], [1], [0, 0, 1, 1], [], []>} : vector<8x128xf32>, vector<128x128xf32>, vector<8x128xf32> -> vector<8x128xf32>
    %c0_34 = arith.constant 0 : index
    %c0_35 = arith.constant 0 : index
    %32 = vector.load %arg7[%c0_34, %c0_35] : memref<128x128xf32, #tpu.memory_space<vmem>>, vector<128x128xf32>
    %cst_36 = arith.constant dense<0.000000e+00> : vector<8x128xf32>
    %33 = tpu.matmul %29, %32, %cst_36 {dimension_numbers = #tpu.dot_dimension_numbers<[1], [0], [0], [1], [0, 0, 1, 1], [], []>} : vector<8x128xf32>, vector<128x128xf32>, vector<8x128xf32> -> vector<8x128xf32>
    %c0_37 = arith.constant 0 : index
    %c0_38 = arith.constant 0 : index
    %34 = vector.load %arg8[%c0_37, %c0_38] : memref<128x128xf32, #tpu.memory_space<vmem>>, vector<128x128xf32>
    %cst_39 = arith.constant dense<0.000000e+00> : vector<8x128xf32>
    %35 = tpu.matmul %29, %34, %cst_39 {dimension_numbers = #tpu.dot_dimension_numbers<[1], [0], [0], [1], [0, 0, 1, 1], [], []>} : vector<8x128xf32>, vector<128x128xf32>, vector<8x128xf32> -> vector<8x128xf32>
    %36 = arith.addf %35, %28 : vector<8x128xf32>
    %37 = arith.index_cast %c0_i32_30 : i32 to index
    %c0_40 = arith.constant 0 : index
    %c0_41 = arith.constant 0 : index
    %38 = vector.load %arg17[%37, %c0_40, %c0_41] : memref<4x8x128xf32, #tpu.memory_space<vmem>>, vector<1x8x128xf32>
    %39 = vector.shape_cast %38 : vector<1x8x128xf32> to vector<8x128xf32>
    %40 = arith.addf %39, %31 : vector<8x128xf32>
    %41 = arith.negf %40 : vector<8x128xf32>
    %42 = math.exp %41 : vector<8x128xf32>
    %cst_42 = arith.constant 1.000000e+00 : f32
    %43 = vector.broadcast %cst_42 : f32 to vector<8x128xf32>
    %44 = arith.addf %43, %42 : vector<8x128xf32>
    %45 = arith.divf %43, %44 : vector<8x128xf32>
    %46 = arith.index_cast %c0_i32_30 : i32 to index
    %c0_43 = arith.constant 0 : index
    %c0_44 = arith.constant 0 : index
    %47 = vector.load %arg18[%46, %c0_43, %c0_44] : memref<4x8x128xf32, #tpu.memory_space<vmem>>, vector<1x8x128xf32>
    %48 = vector.shape_cast %47 : vector<1x8x128xf32> to vector<8x128xf32>
    %49 = arith.addf %48, %33 : vector<8x128xf32>
    %50 = arith.negf %49 : vector<8x128xf32>
    %51 = math.exp %50 : vector<8x128xf32>
    %cst_45 = arith.constant 1.000000e+00 : f32
    %52 = vector.broadcast %cst_45 : f32 to vector<8x128xf32>
    %53 = arith.addf %52, %51 : vector<8x128xf32>
    %54 = arith.divf %52, %53 : vector<8x128xf32>
    %55 = arith.index_cast %c0_i32_30 : i32 to index
    %c0_46 = arith.constant 0 : index
    %c0_47 = arith.constant 0 : index
    %56 = vector.load %arg19[%55, %c0_46, %c0_47] : memref<4x8x128xf32, #tpu.memory_space<vmem>>, vector<1x8x128xf32>
    %57 = vector.shape_cast %56 : vector<1x8x128xf32> to vector<8x128xf32>
    %58 = arith.mulf %45, %36 : vector<8x128xf32>
    %59 = arith.addf %57, %58 : vector<8x128xf32>
    %60 = math.tanh %59 : vector<8x128xf32>
    %cst_48 = arith.constant 1.000000e+00 : f32
    %61 = vector.broadcast %cst_48 : f32 to vector<8x128xf32>
    %62 = arith.subf %61, %54 : vector<8x128xf32>
    %63 = arith.mulf %62, %60 : vector<8x128xf32>
    %64 = arith.mulf %54, %29 : vector<8x128xf32>
    %65 = arith.addf %63, %64 : vector<8x128xf32>
    %c1_i32 = arith.constant 1 : i32
    %c0_49 = arith.constant 0 : index
    %c0_50 = arith.constant 0 : index
    %66 = vector.load %arg6[%c0_49, %c0_50] : memref<128x128xf32, #tpu.memory_space<vmem>>, vector<128x128xf32>
    %cst_51 = arith.constant dense<0.000000e+00> : vector<8x128xf32>
    %67 = tpu.matmul %65, %66, %cst_51 {dimension_numbers = #tpu.dot_dimension_numbers<[1], [0], [0], [1], [0, 0, 1, 1], [], []>} : vector<8x128xf32>, vector<128x128xf32>, vector<8x128xf32> -> vector<8x128xf32>
    %c0_52 = arith.constant 0 : index
    %c0_53 = arith.constant 0 : index
    %68 = vector.load %arg7[%c0_52, %c0_53] : memref<128x128xf32, #tpu.memory_space<vmem>>, vector<128x128xf32>
    %cst_54 = arith.constant dense<0.000000e+00> : vector<8x128xf32>
    %69 = tpu.matmul %65, %68, %cst_54 {dimension_numbers = #tpu.dot_dimension_numbers<[1], [0], [0], [1], [0, 0, 1, 1], [], []>} : vector<8x128xf32>, vector<128x128xf32>, vector<8x128xf32> -> vector<8x128xf32>
    %c0_55 = arith.constant 0 : index
    %c0_56 = arith.constant 0 : index
    %70 = vector.load %arg8[%c0_55, %c0_56] : memref<128x128xf32, #tpu.memory_space<vmem>>, vector<128x128xf32>
    %cst_57 = arith.constant dense<0.000000e+00> : vector<8x128xf32>
    %71 = tpu.matmul %65, %70, %cst_57 {dimension_numbers = #tpu.dot_dimension_numbers<[1], [0], [0], [1], [0, 0, 1, 1], [], []>} : vector<8x128xf32>, vector<128x128xf32>, vector<8x128xf32> -> vector<8x128xf32>
    %72 = arith.addf %71, %28 : vector<8x128xf32>
    %73 = arith.index_cast %c1_i32 : i32 to index
    %c0_58 = arith.constant 0 : index
    %c0_59 = arith.constant 0 : index
    %74 = vector.load %arg17[%73, %c0_58, %c0_59] : memref<4x8x128xf32, #tpu.memory_space<vmem>>, vector<1x8x128xf32>
    %75 = vector.shape_cast %74 : vector<1x8x128xf32> to vector<8x128xf32>
    %76 = arith.addf %75, %67 : vector<8x128xf32>
    %77 = arith.negf %76 : vector<8x128xf32>
    %78 = math.exp %77 : vector<8x128xf32>
    %cst_60 = arith.constant 1.000000e+00 : f32
    %79 = vector.broadcast %cst_60 : f32 to vector<8x128xf32>
    %80 = arith.addf %79, %78 : vector<8x128xf32>
    %81 = arith.divf %79, %80 : vector<8x128xf32>
    %82 = arith.index_cast %c1_i32 : i32 to index
    %c0_61 = arith.constant 0 : index
    %c0_62 = arith.constant 0 : index
    %83 = vector.load %arg18[%82, %c0_61, %c0_62] : memref<4x8x128xf32, #tpu.memory_space<vmem>>, vector<1x8x128xf32>
    %84 = vector.shape_cast %83 : vector<1x8x128xf32> to vector<8x128xf32>
    %85 = arith.addf %84, %69 : vector<8x128xf32>
    %86 = arith.negf %85 : vector<8x128xf32>
    %87 = math.exp %86 : vector<8x128xf32>
    %cst_63 = arith.constant 1.000000e+00 : f32
    %88 = vector.broadcast %cst_63 : f32 to vector<8x128xf32>
    %89 = arith.addf %88, %87 : vector<8x128xf32>
    %90 = arith.divf %88, %89 : vector<8x128xf32>
    %91 = arith.index_cast %c1_i32 : i32 to index
    %c0_64 = arith.constant 0 : index
    %c0_65 = arith.constant 0 : index
    %92 = vector.load %arg19[%91, %c0_64, %c0_65] : memref<4x8x128xf32, #tpu.memory_space<vmem>>, vector<1x8x128xf32>
    %93 = vector.shape_cast %92 : vector<1x8x128xf32> to vector<8x128xf32>
    %94 = arith.mulf %81, %72 : vector<8x128xf32>
    %95 = arith.addf %93, %94 : vector<8x128xf32>
    %96 = math.tanh %95 : vector<8x128xf32>
    %cst_66 = arith.constant 1.000000e+00 : f32
    %97 = vector.broadcast %cst_66 : f32 to vector<8x128xf32>
    %98 = arith.subf %97, %90 : vector<8x128xf32>
    %99 = arith.mulf %98, %96 : vector<8x128xf32>
    %100 = arith.mulf %90, %65 : vector<8x128xf32>
    %101 = arith.addf %99, %100 : vector<8x128xf32>
    %c2_i32 = arith.constant 2 : i32
    %c0_67 = arith.constant 0 : index
    %c0_68 = arith.constant 0 : index
    %102 = vector.load %arg6[%c0_67, %c0_68] : memref<128x128xf32, #tpu.memory_space<vmem>>, vector<128x128xf32>
    %cst_69 = arith.constant dense<0.000000e+00> : vector<8x128xf32>
    %103 = tpu.matmul %101, %102, %cst_69 {dimension_numbers = #tpu.dot_dimension_numbers<[1], [0], [0], [1], [0, 0, 1, 1], [], []>} : vector<8x128xf32>, vector<128x128xf32>, vector<8x128xf32> -> vector<8x128xf32>
    %c0_70 = arith.constant 0 : index
    %c0_71 = arith.constant 0 : index
    %104 = vector.load %arg7[%c0_70, %c0_71] : memref<128x128xf32, #tpu.memory_space<vmem>>, vector<128x128xf32>
    %cst_72 = arith.constant dense<0.000000e+00> : vector<8x128xf32>
    %105 = tpu.matmul %101, %104, %cst_72 {dimension_numbers = #tpu.dot_dimension_numbers<[1], [0], [0], [1], [0, 0, 1, 1], [], []>} : vector<8x128xf32>, vector<128x128xf32>, vector<8x128xf32> -> vector<8x128xf32>
    %c0_73 = arith.constant 0 : index
    %c0_74 = arith.constant 0 : index
    %106 = vector.load %arg8[%c0_73, %c0_74] : memref<128x128xf32, #tpu.memory_space<vmem>>, vector<128x128xf32>
    %cst_75 = arith.constant dense<0.000000e+00> : vector<8x128xf32>
    %107 = tpu.matmul %101, %106, %cst_75 {dimension_numbers = #tpu.dot_dimension_numbers<[1], [0], [0], [1], [0, 0, 1, 1], [], []>} : vector<8x128xf32>, vector<128x128xf32>, vector<8x128xf32> -> vector<8x128xf32>
    %108 = arith.addf %107, %28 : vector<8x128xf32>
    %109 = arith.index_cast %c2_i32 : i32 to index
    %c0_76 = arith.constant 0 : index
    %c0_77 = arith.constant 0 : index
    %110 = vector.load %arg17[%109, %c0_76, %c0_77] : memref<4x8x128xf32, #tpu.memory_space<vmem>>, vector<1x8x128xf32>
    %111 = vector.shape_cast %110 : vector<1x8x128xf32> to vector<8x128xf32>
    %112 = arith.addf %111, %103 : vector<8x128xf32>
    %113 = arith.negf %112 : vector<8x128xf32>
    %114 = math.exp %113 : vector<8x128xf32>
    %cst_78 = arith.constant 1.000000e+00 : f32
    %115 = vector.broadcast %cst_78 : f32 to vector<8x128xf32>
    %116 = arith.addf %115, %114 : vector<8x128xf32>
    %117 = arith.divf %115, %116 : vector<8x128xf32>
    %118 = arith.index_cast %c2_i32 : i32 to index
    %c0_79 = arith.constant 0 : index
    %c0_80 = arith.constant 0 : index
    %119 = vector.load %arg18[%118, %c0_79, %c0_80] : memref<4x8x128xf32, #tpu.memory_space<vmem>>, vector<1x8x128xf32>
    %120 = vector.shape_cast %119 : vector<1x8x128xf32> to vector<8x128xf32>
    %121 = arith.addf %120, %105 : vector<8x128xf32>
    %122 = arith.negf %121 : vector<8x128xf32>
    %123 = math.exp %122 : vector<8x128xf32>
    %cst_81 = arith.constant 1.000000e+00 : f32
    %124 = vector.broadcast %cst_81 : f32 to vector<8x128xf32>
    %125 = arith.addf %124, %123 : vector<8x128xf32>
    %126 = arith.divf %124, %125 : vector<8x128xf32>
    %127 = arith.index_cast %c2_i32 : i32 to index
    %c0_82 = arith.constant 0 : index
    %c0_83 = arith.constant 0 : index
    %128 = vector.load %arg19[%127, %c0_82, %c0_83] : memref<4x8x128xf32, #tpu.memory_space<vmem>>, vector<1x8x128xf32>
    %129 = vector.shape_cast %128 : vector<1x8x128xf32> to vector<8x128xf32>
    %130 = arith.mulf %117, %108 : vector<8x128xf32>
    %131 = arith.addf %129, %130 : vector<8x128xf32>
    %132 = math.tanh %131 : vector<8x128xf32>
    %cst_84 = arith.constant 1.000000e+00 : f32
    %133 = vector.broadcast %cst_84 : f32 to vector<8x128xf32>
    %134 = arith.subf %133, %126 : vector<8x128xf32>
    %135 = arith.mulf %134, %132 : vector<8x128xf32>
    %136 = arith.mulf %126, %101 : vector<8x128xf32>
    %137 = arith.addf %135, %136 : vector<8x128xf32>
    %c3_i32 = arith.constant 3 : i32
    %c0_85 = arith.constant 0 : index
    %c0_86 = arith.constant 0 : index
    %138 = vector.load %arg6[%c0_85, %c0_86] : memref<128x128xf32, #tpu.memory_space<vmem>>, vector<128x128xf32>
    %cst_87 = arith.constant dense<0.000000e+00> : vector<8x128xf32>
    %139 = tpu.matmul %137, %138, %cst_87 {dimension_numbers = #tpu.dot_dimension_numbers<[1], [0], [0], [1], [0, 0, 1, 1], [], []>} : vector<8x128xf32>, vector<128x128xf32>, vector<8x128xf32> -> vector<8x128xf32>
    %c0_88 = arith.constant 0 : index
    %c0_89 = arith.constant 0 : index
    %140 = vector.load %arg7[%c0_88, %c0_89] : memref<128x128xf32, #tpu.memory_space<vmem>>, vector<128x128xf32>
    %cst_90 = arith.constant dense<0.000000e+00> : vector<8x128xf32>
    %141 = tpu.matmul %137, %140, %cst_90 {dimension_numbers = #tpu.dot_dimension_numbers<[1], [0], [0], [1], [0, 0, 1, 1], [], []>} : vector<8x128xf32>, vector<128x128xf32>, vector<8x128xf32> -> vector<8x128xf32>
    %c0_91 = arith.constant 0 : index
    %c0_92 = arith.constant 0 : index
    %142 = vector.load %arg8[%c0_91, %c0_92] : memref<128x128xf32, #tpu.memory_space<vmem>>, vector<128x128xf32>
    %cst_93 = arith.constant dense<0.000000e+00> : vector<8x128xf32>
    %143 = tpu.matmul %137, %142, %cst_93 {dimension_numbers = #tpu.dot_dimension_numbers<[1], [0], [0], [1], [0, 0, 1, 1], [], []>} : vector<8x128xf32>, vector<128x128xf32>, vector<8x128xf32> -> vector<8x128xf32>
    %144 = arith.addf %143, %28 : vector<8x128xf32>
    %145 = arith.index_cast %c3_i32 : i32 to index
    %c0_94 = arith.constant 0 : index
    %c0_95 = arith.constant 0 : index
    %146 = vector.load %arg17[%145, %c0_94, %c0_95] : memref<4x8x128xf32, #tpu.memory_space<vmem>>, vector<1x8x128xf32>
    %147 = vector.shape_cast %146 : vector<1x8x128xf32> to vector<8x128xf32>
    %148 = arith.addf %147, %139 : vector<8x128xf32>
    %149 = arith.negf %148 : vector<8x128xf32>
    %150 = math.exp %149 : vector<8x128xf32>
    %cst_96 = arith.constant 1.000000e+00 : f32
    %151 = vector.broadcast %cst_96 : f32 to vector<8x128xf32>
    %152 = arith.addf %151, %150 : vector<8x128xf32>
    %153 = arith.divf %151, %152 : vector<8x128xf32>
    %154 = arith.index_cast %c3_i32 : i32 to index
    %c0_97 = arith.constant 0 : index
    %c0_98 = arith.constant 0 : index
    %155 = vector.load %arg18[%154, %c0_97, %c0_98] : memref<4x8x128xf32, #tpu.memory_space<vmem>>, vector<1x8x128xf32>
    %156 = vector.shape_cast %155 : vector<1x8x128xf32> to vector<8x128xf32>
    %157 = arith.addf %156, %141 : vector<8x128xf32>
    %158 = arith.negf %157 : vector<8x128xf32>
    %159 = math.exp %158 : vector<8x128xf32>
    %cst_99 = arith.constant 1.000000e+00 : f32
    %160 = vector.broadcast %cst_99 : f32 to vector<8x128xf32>
    %161 = arith.addf %160, %159 : vector<8x128xf32>
    %162 = arith.divf %160, %161 : vector<8x128xf32>
    %163 = arith.index_cast %c3_i32 : i32 to index
    %c0_100 = arith.constant 0 : index
    %c0_101 = arith.constant 0 : index
    %164 = vector.load %arg19[%163, %c0_100, %c0_101] : memref<4x8x128xf32, #tpu.memory_space<vmem>>, vector<1x8x128xf32>
    %165 = vector.shape_cast %164 : vector<1x8x128xf32> to vector<8x128xf32>
    %166 = arith.mulf %153, %144 : vector<8x128xf32>
    %167 = arith.addf %165, %166 : vector<8x128xf32>
    %168 = math.tanh %167 : vector<8x128xf32>
    %cst_102 = arith.constant 1.000000e+00 : f32
    %169 = vector.broadcast %cst_102 : f32 to vector<8x128xf32>
    %170 = arith.subf %169, %162 : vector<8x128xf32>
    %171 = arith.mulf %170, %168 : vector<8x128xf32>
    %172 = arith.mulf %162, %137 : vector<8x128xf32>
    %173 = arith.addf %171, %172 : vector<8x128xf32>
    %c4_i32 = arith.constant 4 : i32
    %c0_103 = arith.constant 0 : index
    %c0_104 = arith.constant 0 : index
    %174 = vector.load %arg16[%c0_103, %c0_104] : memref<8x128xf32, #tpu.memory_space<vmem>>, vector<8x128xf32>
    tpu.vector_store %arg16[%c0_103, %c0_104], %173 {strides = array<i32>} : memref<8x128xf32, #tpu.memory_space<vmem>>, vector<8x128xf32>,
    %c1_i32_105 = arith.constant 1 : i32
    %175 = arith.cmpi eq, %arg1, %c1_i32_105 : i32
    %176 = arith.extui %175 : i1 to i32
    %c0_i32_106 = arith.constant 0 : i32
    %177 = arith.cmpi ne, %176, %c0_i32_106 : i32
    scf.if %177 {
      %c0_107 = arith.constant 0 : index
      %c0_108 = arith.constant 0 : index
      %178 = vector.load %arg13[%c0_107, %c0_108] : memref<128x128xf32, #tpu.memory_space<vmem>>, vector<128x128xf32>
      %cst_109 = arith.constant dense<0.000000e+00> : vector<8x128xf32>
      %179 = tpu.matmul %173, %178, %cst_109 {dimension_numbers = #tpu.dot_dimension_numbers<[1], [0], [0], [1], [0, 0, 1, 1], [], []>} : vector<8x128xf32>, vector<128x128xf32>, vector<8x128xf32> -> vector<8x128xf32>
      %c0_110 = arith.constant 0 : index
      %c0_111 = arith.constant 0 : index
      %180 = vector.load %arg14[%c0_110, %c0_111] : memref<1x128xf32, #tpu.memory_space<vmem>>, vector<1x128xf32>
      %181 = vector.broadcast %180 : vector<1x128xf32> to vector<8x128xf32>
      %182 = arith.addf %179, %181 : vector<8x128xf32>
      %cst_112 = arith.constant dense<0xFF800000> : vector<8xf32>
      %183 = vector.multi_reduction <maximumf>, %182, %cst_112 [1] : vector<8x128xf32> to vector<8xf32>
      %184 = vector.shape_cast %183 : vector<8xf32> to vector<8x1xf32>
      %185 = vector.broadcast %184 : vector<8x1xf32> to vector<8x128xf32>
      %186 = arith.subf %182, %185 : vector<8x128xf32>
      %187 = math.exp %186 : vector<8x128xf32>
      %cst_113 = arith.constant dense<0.000000e+00> : vector<8xf32>
      %188 = vector.multi_reduction <add>, %187, %cst_113 [1] : vector<8x128xf32> to vector<8xf32>
      %189 = vector.shape_cast %188 : vector<8xf32> to vector<8x1xf32>
      %190 = math.log %189 : vector<8x1xf32>
      %191 = arith.addf %190, %184 : vector<8x1xf32>
      %192 = vector.broadcast %191 : vector<8x1xf32> to vector<8x128xf32>
      %193 = arith.subf %182, %192 : vector<8x128xf32>
      %c0_114 = arith.constant 0 : index
      %c0_115 = arith.constant 0 : index
      %194 = vector.load %arg15[%c0_114, %c0_115] : memref<8x128xf32, #tpu.memory_space<vmem>>, vector<8x128xf32>
      tpu.vector_store %arg15[%c0_114, %c0_115], %193 {strides = array<i32>} : memref<8x128xf32, #tpu.memory_space<vmem>>, vector<8x128xf32>,
    } else {
    }
    return
  }
  func.func @transform_0(%arg0: i32, %arg1: i32) -> (i32, i32, i32) {
    %c0_i32 = arith.constant 0 : i32
    %c0_i32_0 = arith.constant 0 : i32
    return %arg1, %arg0, %c0_i32 : i32, i32, i32
  }
  func.func @transform_1(%arg0: i32, %arg1: i32) -> (i32, i32) {
    %c0_i32 = arith.constant 0 : i32
    %c0_i32_0 = arith.constant 0 : i32
    %c0_i32_1 = arith.constant 0 : i32
    return %c0_i32, %c0_i32_0 : i32, i32
  }
  func.func @transform_2(%arg0: i32, %arg1: i32) -> (i32, i32) {
    %c0_i32 = arith.constant 0 : i32
    %c0_i32_0 = arith.constant 0 : i32
    %c0_i32_1 = arith.constant 0 : i32
    return %c0_i32, %c0_i32_0 : i32, i32
  }
  func.func @transform_3(%arg0: i32, %arg1: i32) -> (i32, i32) {
    %c0_i32 = arith.constant 0 : i32
    %c0_i32_0 = arith.constant 0 : i32
    %c0_i32_1 = arith.constant 0 : i32
    return %c0_i32, %c0_i32_0 : i32, i32
  }
  func.func @transform_4(%arg0: i32, %arg1: i32) -> (i32, i32) {
    %c0_i32 = arith.constant 0 : i32
    %c0_i32_0 = arith.constant 0 : i32
    %c0_i32_1 = arith.constant 0 : i32
    return %c0_i32, %c0_i32_0 : i32, i32
  }
  func.func @transform_5(%arg0: i32, %arg1: i32) -> (i32, i32) {
    %c0_i32 = arith.constant 0 : i32
    %c0_i32_0 = arith.constant 0 : i32
    %c0_i32_1 = arith.constant 0 : i32
    return %c0_i32, %c0_i32_0 : i32, i32
  }
  func.func @transform_6(%arg0: i32, %arg1: i32) -> (i32, i32) {
    %c0_i32 = arith.constant 0 : i32
    %c0_i32_0 = arith.constant 0 : i32
    %c0_i32_1 = arith.constant 0 : i32
    return %c0_i32, %c0_i32_0 : i32, i32
  }
  func.func @transform_7(%arg0: i32, %arg1: i32) -> (i32, i32) {
    %c0_i32 = arith.constant 0 : i32
    %c0_i32_0 = arith.constant 0 : i32
    %c0_i32_1 = arith.constant 0 : i32
    return %c0_i32, %c0_i32_0 : i32, i32
  }
  func.func @transform_8(%arg0: i32, %arg1: i32) -> (i32, i32) {
    %c0_i32 = arith.constant 0 : i32
    %c0_i32_0 = arith.constant 0 : i32
    %c0_i32_1 = arith.constant 0 : i32
    return %c0_i32, %c0_i32_0 : i32, i32
  }
  func.func @transform_9(%arg0: i32, %arg1: i32) -> (i32, i32) {
    %c0_i32 = arith.constant 0 : i32
    %c0_i32_0 = arith.constant 0 : i32
    %c0_i32_1 = arith.constant 0 : i32
    return %c0_i32, %c0_i32_0 : i32, i32
  }
  func.func @transform_10(%arg0: i32, %arg1: i32) -> (i32, i32) {
    %c0_i32 = arith.constant 0 : i32
    %c0_i32_0 = arith.constant 0 : i32
    %c0_i32_1 = arith.constant 0 : i32
    return %c0_i32, %c0_i32_0 : i32, i32
  }
  func.func @transform_11(%arg0: i32, %arg1: i32) -> (i32, i32) {
    %c0_i32 = arith.constant 0 : i32
    %c0_i32_0 = arith.constant 0 : i32
    %c0_i32_1 = arith.constant 0 : i32
    return %c0_i32, %c0_i32_0 : i32, i32
  }
  func.func @transform_12(%arg0: i32, %arg1: i32) -> (i32, i32) {
    %c0_i32 = arith.constant 0 : i32
    %c0_i32_0 = arith.constant 0 : i32
    %c0_i32_1 = arith.constant 0 : i32
    return %c0_i32, %c0_i32_0 : i32, i32
  }
  func.func @transform_13(%arg0: i32, %arg1: i32) -> (i32, i32) {
    %c0_i32 = arith.constant 0 : i32
    %c0_i32_0 = arith.constant 0 : i32
    return %arg0, %c0_i32 : i32, i32
  }
}

</mosaic_0001>

<llo_original>
// kernel: tpu_custom_call.1
$region0: #{tpu_custom_call.1}
  #allocation0 [shape = 'u32[]', space=smem, size = 0x4, offset = 0x4, fixed_abs, tag = 'smem constant byte address 0x4 - core index']
  #allocation1 [shape = 'u32[72,128]{1,0:T(1,128)}', space=vmem, size = 0x9000, scoped, tag = 'internal scratch']
  #allocation2 [shape = 'f32[8,128]{1,0:T(8,128)}', space=vmem, size = 0x1000, scoped, tag = 'scratch operand']
  #allocation3 [shape = 'f32[4,8,128]{2,1,0:T(8,128)}', space=vmem, size = 0x4000, scoped, tag = 'scratch operand']
  #allocation4 [shape = 'f32[4,8,128]{2,1,0:T(8,128)}', space=vmem, size = 0x4000, scoped, tag = 'scratch operand']
  #allocation5 [shape = 'f32[4,8,128]{2,1,0:T(8,128)}', space=vmem, size = 0x4000, scoped, tag = 'scratch operand']
  %s0 = inlined_call_operand.hbm [shape: f32[8,8,128], index: 0, kind: input, shape index: {}]
  %s1 = inlined_call_operand.hbm [shape: f32[128,128], index: 1, kind: input, shape index: {}]
  %s2 = inlined_call_operand.hbm [shape: f32[128,128], index: 2, kind: input, shape index: {}]
  %s3 = inlined_call_operand.hbm [shape: f32[128,128], index: 3, kind: input, shape index: {}]
  %s4 = inlined_call_operand.hbm [shape: f32[128,128], index: 4, kind: input, shape index: {}]
  %s5 = inlined_call_operand.hbm [shape: f32[128,128], index: 5, kind: input, shape index: {}]
  %s6 = inlined_call_operand.hbm [shape: f32[128,128], index: 6, kind: input, shape index: {}]
  %s7 = inlined_call_operand.vmem [shape: f32[1,128], index: 7, kind: input, shape index: {}]
  %s8 = inlined_call_operand.vmem [shape: f32[1,128], index: 8, kind: input, shape index: {}]
  %s9 = inlined_call_operand.vmem [shape: f32[1,128], index: 9, kind: input, shape index: {}]
  %s10 = inlined_call_operand.vmem [shape: f32[1,128], index: 10, kind: input, shape index: {}]
  %s11 = inlined_call_operand.hbm [shape: f32[128,128], index: 11, kind: input, shape index: {}]
  %s12 = inlined_call_operand.vmem [shape: f32[1,128], index: 12, kind: input, shape index: {}]
  %s13 = inlined_call_operand.hbm [shape: f32[8,128], index: 13, kind: output, shape index: {}]
  %s14 = sld [smem:[#allocation0]]
  $region125: #{tpu_custom_call.1} parent=0
    _
  %s16 = ssub.s32 1, %s14
  %s17 = scalar_select 0, %s16, %s14
  $region1: #{tpu_custom_call.1} parent=0
    #allocation6 [shape = 'u8[32768]{0}', space=vmem, size = 0x8000, scoped, tag = 'input window, operand 0']
    #allocation7 [shape = 's32[2]{0}', space=sflag, size = 0x8, scoped, tag = 'scoped memory for tpu_custom_call.1']
    #allocation8 [shape = 's32[2]{0}', space=sflag, size = 0x8, scoped, tag = 'scoped memory for tpu_custom_call.1']
    #allocation9 [shape = 'u8[65536]{0}', space=vmem, size = 0x10000, scoped, tag = 'input window, operand 1, single buffered']
    #allocation10 [shape = 's32[1]{0}', space=sflag, size = 0x4, scoped, tag = 'scoped memory for tpu_custom_call.1']
    #allocation11 [shape = 'u8[65536]{0}', space=vmem, size = 0x10000, scoped, tag = 'input window, operand 2, single buffered']
    #allocation12 [shape = 'u8[65536]{0}', space=vmem, size = 0x10000, scoped, tag = 'input window, operand 3, single buffered']
    #allocation13 [shape = 's32[1]{0}', space=sflag, size = 0x4, scoped, tag = 'scoped memory for tpu_custom_call.1']
    #allocation14 [shape = 'u8[65536]{0}', space=vmem, size = 0x10000, scoped, tag = 'input window, operand 4, single buffered']
    #allocation15 [shape = 'u8[65536]{0}', space=vmem, size = 0x10000, scoped, tag = 'input window, operand 5, single buffered']
    #allocation16 [shape = 's32[1]{0}', space=sflag, size = 0x4, scoped, tag = 'scoped memory for tpu_custom_call.1']
    #allocation17 [shape = 'u8[65536]{0}', space=vmem, size = 0x10000, scoped, tag = 'input window, operand 6, single buffered']
    #allocation18 [shape = 'u8[65536]{0}', space=vmem, size = 0x10000, scoped, tag = 'input window, operand 11, single buffered']
    #allocation19 [shape = 's32[1]{0}', space=sflag, size = 0x4, scoped, tag = 'scoped memory for tpu_custom_call.1']
    #allocation20 [shape = 'u8[4096]{0}', space=vmem, size = 0x1000, scoped, tag = 'output window, operand 0, single buffered']
    %18 = vsyncpa [#allocation7], 0
    %s19 = scalar_lea.sflag [#allocation7], 1
    %20 = vsyncpa %s19, 0
    %21 = vsyncpa [#allocation10], 0
    %22 = vsyncpa [#allocation13], 0
    %23 = vsyncpa [#allocation16], 0
    %24 = vsyncpa [#allocation19], 0
    %25 = vsyncpa [#allocation8], 0
    loop: start=0, step=1, limit=4
    $region2: #{tpu_custom_call.1} parent=1 // loop_pre_header
      _
    $region3: #{tpu_custom_call.1} parent=1 // loop_header
      %s27 = sphi 0, %s31
      %p28 = scmp.ge.s32.totalorder %s27, 4
      %s34 = sphi 0, %s46
      %s35 = sphi 0, %s42
      %s36 = sphi 0, %s34
      %s37 = sphi 0, %s35
      %s38 = sphi 0, %s36
      %s39 = sphi 0, %s37
      %s51 = sphi 0, %s53
      %s54 = sphi 0, %s51
      %s55 = sphi 0, %s54
      %s71 = sphi 0, %s55
      %s75 = sphi 0, %s75
      %s77 = sphi 0, %s75
      %s78 = sphi 0, %s77
      %s92 = sphi 0, %s78
      %s96 = sphi 0, %s96
      %s98 = sphi 0, %s96
      %s99 = sphi 0, %s98
      %s113 = sphi 0, %s99
      %s117 = sphi 0, %s117
      %s119 = sphi 0, %s117
      %s120 = sphi 0, %s119
      %s134 = sphi 0, %s120
      %s138 = sphi 0, %s138
      %s140 = sphi 0, %s138
      %s141 = sphi 0, %s140
      %s155 = sphi 0, %s141
      %s159 = sphi 0, %s159
      %s161 = sphi 0, %s159
      %s162 = sphi 0, %s161
      %s176 = sphi 0, %s162
      %s180 = sphi 0, %s180
      %s182 = sphi 0, %s180
      %s183 = sphi 0, %s182
      %s197 = sphi 0, %s183
      %s201 = sphi 0, %s201
      %s203 = sphi 0, %s201
      %s204 = sphi 0, %s203
      %s218 = sphi 0, %s204
      %s222 = sphi 0, %s222
      %s224 = sphi 0, %s222
      %s225 = sphi 0, %s224
      %s239 = sphi 0, %s225
      %s243 = sphi 0, %s243
      %s245 = sphi 0, %s243
      %s246 = sphi 0, %s245
      %s260 = sphi 0, %s246
      %s264 = sphi 0, %s264
      %s266 = sphi 0, %s264
      %s267 = sphi 0, %s266
      %s281 = sphi 0, %s267
      %s285 = sphi 0, %s285
      %s287 = sphi 0, %s285
      %s288 = sphi 0, %s287
      %s302 = sphi 0, %s288
      %s306 = sphi 0, %s306
      %s308 = sphi 0, %s306
      %s309 = sphi 0, %s308
      %s323 = sphi 0, %s309
      %s329 = sphi 0, %s331
      %s332 = sphi 0, %s329
      %s333 = sphi 0, %s332
      %s349 = sphi 0, %s333
    $region4: #{tpu_custom_call.1} parent=1 // loop_header_branch
      %30 = sbr.rel (%p28) target = $region8
    $region5: #{tpu_custom_call.1} parent=1 // loop_body
      %s32 = ssub.s32 %s27, 1
      %s33 = ssub.s32 %s27, 2
      %s40 = sadd.s32 1, %s35
      %p41 = scmp.ge.s32.totalorder %s40, 2
      %s42 = scalar_select %p41, 0, %s40
      %s43 = sadd.s32 1, %s34
      %s44 = scalar_select %p41, %s43, %s34
      %p45 = scmp.ge.s32.totalorder %s44, 1
      %s46 = scalar_select %p45, 0, %s44
      %s47 = ssub.s32 %s35, %s42
      %s48 = ssub.s32 %s34, %s46
      %s49 = sor.u32 %s47, %s48
      %p50 = scmp.eq.s32.totalorder %s49, 0
      %s52 = sadd.s32 %s51, 1
      %s53 = scalar_select %p50, %s51, %s52
      %p56 = pneg %p50
      %p57 = scmp.eq.s32.totalorder %s27, 1
      %p58 = por %p56, %p57
      %p59 = scmp.ne.s32.totalorder %s51, %s54
      %p60 = scmp.eq.s32.totalorder %s27, 0
      %p61 = por %p59, %p60
      %p62 = scmp.ne.s32.totalorder %s51, %s54
      %p63 = scmp.eq.s32.totalorder %s32, 1
      %p64 = por %p62, %p63
      %p65 = scmp.ne.s32.totalorder %s54, %s55
      %p66 = scmp.eq.s32.totalorder %s32, 0
      %p67 = por %p65, %p66
      %p68 = scmp.ne.s32.totalorder %s54, %s55
      %p69 = scmp.eq.s32.totalorder %s33, 1
      %p70 = por %p68, %p69
      %p72 = scmp.ne.s32.totalorder %s55, %s71
      %p73 = scmp.eq.s32.totalorder %s33, 0
      %p74 = por %p72, %p73
      %s76 = sadd.s32 %s75, 1
      %p79 = scmp.eq.s32.totalorder %s27, 1
      %p80 = scmp.ne.s32.totalorder %s75, %s77
      %p81 = scmp.eq.s32.totalorder %s27, 0
      %p82 = por %p80, %p81
      %p83 = scmp.ne.s32.totalorder %s75, %s77
      %p84 = scmp.eq.s32.totalorder %s32, 1
      %p85 = por %p83, %p84
      %p86 = scmp.ne.s32.totalorder %s77, %s78
      %p87 = scmp.eq.s32.totalorder %s32, 0
      %p88 = por %p86, %p87
      %p89 = scmp.ne.s32.totalorder %s77, %s78
      %p90 = scmp.eq.s32.totalorder %s33, 1
      %p91 = por %p89, %p90
      %p93 = scmp.ne.s32.totalorder %s78, %s92
      %p94 = scmp.eq.s32.totalorder %s33, 0
      %p95 = por %p93, %p94
      %s97 = sadd.s32 %s96, 1
      %p100 = scmp.eq.s32.totalorder %s27, 1
      %p101 = scmp.ne.s32.totalorder %s96, %s98
      %p102 = scmp.eq.s32.totalorder %s27, 0
      %p103 = por %p101, %p102
      %p104 = scmp.ne.s32.totalorder %s96, %s98
      %p105 = scmp.eq.s32.totalorder %s32, 1
      %p106 = por %p104, %p105
      %p107 = scmp.ne.s32.totalorder %s98, %s99
      %p108 = scmp.eq.s32.totalorder %s32, 0
      %p109 = por %p107, %p108
      %p110 = scmp.ne.s32.totalorder %s98, %s99
      %p111 = scmp.eq.s32.totalorder %s33, 1
      %p112 = por %p110, %p111
      %p114 = scmp.ne.s32.totalorder %s99, %s113
      %p115 = scmp.eq.s32.totalorder %s33, 0
      %p116 = por %p114, %p115
      %s118 = sadd.s32 %s117, 1
      %p121 = scmp.eq.s32.totalorder %s27, 1
      %p122 = scmp.ne.s32.totalorder %s117, %s119
      %p123 = scmp.eq.s32.totalorder %s27, 0
      %p124 = por %p122, %p123
      %p125 = scmp.ne.s32.totalorder %s117, %s119
      %p126 = scmp.eq.s32.totalorder %s32, 1
      %p127 = por %p125, %p126
      %p128 = scmp.ne.s32.totalorder %s119, %s120
      %p129 = scmp.eq.s32.totalorder %s32, 0
      %p130 = por %p128, %p129
      %p131 = scmp.ne.s32.totalorder %s119, %s120
      %p132 = scmp.eq.s32.totalorder %s33, 1
      %p133 = por %p131, %p132
      %p135 = scmp.ne.s32.totalorder %s120, %s134
      %p136 = scmp.eq.s32.totalorder %s33, 0
      %p137 = por %p135, %p136
      %s139 = sadd.s32 %s138, 1
      %p142 = scmp.eq.s32.totalorder %s27, 1
      %p143 = scmp.ne.s32.totalorder %s138, %s140
      %p144 = scmp.eq.s32.totalorder %s27, 0
      %p145 = por %p143, %p144
      %p146 = scmp.ne.s32.totalorder %s138, %s140
      %p147 = scmp.eq.s32.totalorder %s32, 1
      %p148 = por %p146, %p147
      %p149 = scmp.ne.s32.totalorder %s140, %s141
      %p150 = scmp.eq.s32.totalorder %s32, 0
      %p151 = por %p149, %p150
      %p152 = scmp.ne.s32.totalorder %s140, %s141
      %p153 = scmp.eq.s32.totalorder %s33, 1
      %p154 = por %p152, %p153
      %p156 = scmp.ne.s32.totalorder %s141, %s155
      %p157 = scmp.eq.s32.totalorder %s33, 0
      %p158 = por %p156, %p157
      %s160 = sadd.s32 %s159, 1
      %p163 = scmp.eq.s32.totalorder %s27, 1
      %p164 = scmp.ne.s32.totalorder %s159, %s161
      %p165 = scmp.eq.s32.totalorder %s27, 0
      %p166 = por %p164, %p165
      %p167 = scmp.ne.s32.totalorder %s159, %s161
      %p168 = scmp.eq.s32.totalorder %s32, 1
      %p169 = por %p167, %p168
      %p170 = scmp.ne.s32.totalorder %s161, %s162
      %p171 = scmp.eq.s32.totalorder %s32, 0
      %p172 = por %p170, %p171
      %p173 = scmp.ne.s32.totalorder %s161, %s162
      %p174 = scmp.eq.s32.totalorder %s33, 1
      %p175 = por %p173, %p174
      %p177 = scmp.ne.s32.totalorder %s162, %s176
      %p178 = scmp.eq.s32.totalorder %s33, 0
      %p179 = por %p177, %p178
      %s181 = sadd.s32 %s180, 1
      %p184 = scmp.eq.s32.totalorder %s27, 1
      %p185 = scmp.ne.s32.totalorder %s180, %s182
      %p186 = scmp.eq.s32.totalorder %s27, 0
      %p187 = por %p185, %p186
      %p188 = scmp.ne.s32.totalorder %s180, %s182
      %p189 = scmp.eq.s32.totalorder %s32, 1
      %p190 = por %p188, %p189
      %p191 = scmp.ne.s32.totalorder %s182, %s183
      %p192 = scmp.eq.s32.totalorder %s32, 0
      %p193 = por %p191, %p192
      %p194 = scmp.ne.s32.totalorder %s182, %s183
      %p195 = scmp.eq.s32.totalorder %s33, 1
      %p196 = por %p194, %p195
      %p198 = scmp.ne.s32.totalorder %s183, %s197
      %p199 = scmp.eq.s32.totalorder %s33, 0
      %p200 = por %p198, %p199
      %s202 = sadd.s32 %s201, 1
      %p205 = scmp.eq.s32.totalorder %s27, 1
      %p206 = scmp.ne.s32.totalorder %s201, %s203
      %p207 = scmp.eq.s32.totalorder %s27, 0
      %p208 = por %p206, %p207
      %p209 = scmp.ne.s32.totalorder %s201, %s203
      %p210 = scmp.eq.s32.totalorder %s32, 1
      %p211 = por %p209, %p210
      %p212 = scmp.ne.s32.totalorder %s203, %s204
      %p213 = scmp.eq.s32.totalorder %s32, 0
      %p214 = por %p212, %p213
      %p215 = scmp.ne.s32.totalorder %s203, %s204
      %p216 = scmp.eq.s32.totalorder %s33, 1
      %p217 = por %p215, %p216
      %p219 = scmp.ne.s32.totalorder %s204, %s218
      %p220 = scmp.eq.s32.totalorder %s33, 0
      %p221 = por %p219, %p220
      %s223 = sadd.s32 %s222, 1
      %p226 = scmp.eq.s32.totalorder %s27, 1
      %p227 = scmp.ne.s32.totalorder %s222, %s224
      %p228 = scmp.eq.s32.totalorder %s27, 0
      %p229 = por %p227, %p228
      %p230 = scmp.ne.s32.totalorder %s222, %s224
      %p231 = scmp.eq.s32.totalorder %s32, 1
      %p232 = por %p230, %p231
      %p233 = scmp.ne.s32.totalorder %s224, %s225
      %p234 = scmp.eq.s32.totalorder %s32, 0
      %p235 = por %p233, %p234
      %p236 = scmp.ne.s32.totalorder %s224, %s225
      %p237 = scmp.eq.s32.totalorder %s33, 1
      %p238 = por %p236, %p237
      %p240 = scmp.ne.s32.totalorder %s225, %s239
      %p241 = scmp.eq.s32.totalorder %s33, 0
      %p242 = por %p240, %p241
      %s244 = sadd.s32 %s243, 1
      %p247 = scmp.eq.s32.totalorder %s27, 1
      %p248 = scmp.ne.s32.totalorder %s243, %s245
      %p249 = scmp.eq.s32.totalorder %s27, 0
      %p250 = por %p248, %p249
      %p251 = scmp.ne.s32.totalorder %s243, %s245
      %p252 = scmp.eq.s32.totalorder %s32, 1
      %p253 = por %p251, %p252
      %p254 = scmp.ne.s32.totalorder %s245, %s246
      %p255 = scmp.eq.s32.totalorder %s32, 0
      %p256 = por %p254, %p255
      %p257 = scmp.ne.s32.totalorder %s245, %s246
      %p258 = scmp.eq.s32.totalorder %s33, 1
      %p259 = por %p257, %p258
      %p261 = scmp.ne.s32.totalorder %s246, %s260
      %p262 = scmp.eq.s32.totalorder %s33, 0
      %p263 = por %p261, %p262
      %s265 = sadd.s32 %s264, 1
      %p268 = scmp.eq.s32.totalorder %s27, 1
      %p269 = scmp.ne.s32.totalorder %s264, %s266
      %p270 = scmp.eq.s32.totalorder %s27, 0
      %p271 = por %p269, %p270
      %p272 = scmp.ne.s32.totalorder %s264, %s266
      %p273 = scmp.eq.s32.totalorder %s32, 1
      %p274 = por %p272, %p273
      %p275 = scmp.ne.s32.totalorder %s266, %s267
      %p276 = scmp.eq.s32.totalorder %s32, 0
      %p277 = por %p275, %p276
      %p278 = scmp.ne.s32.totalorder %s266, %s267
      %p279 = scmp.eq.s32.totalorder %s33, 1
      %p280 = por %p278, %p279
      %p282 = scmp.ne.s32.totalorder %s267, %s281
      %p283 = scmp.eq.s32.totalorder %s33, 0
      %p284 = por %p282, %p283
      %s286 = sadd.s32 %s285, 1
      %p289 = scmp.eq.s32.totalorder %s27, 1
      %p290 = scmp.ne.s32.totalorder %s285, %s287
      %p291 = scmp.eq.s32.totalorder %s27, 0
      %p292 = por %p290, %p291
      %p293 = scmp.ne.s32.totalorder %s285, %s287
      %p294 = scmp.eq.s32.totalorder %s32, 1
      %p295 = por %p293, %p294
      %p296 = scmp.ne.s32.totalorder %s287, %s288
      %p297 = scmp.eq.s32.totalorder %s32, 0
      %p298 = por %p296, %p297
      %p299 = scmp.ne.s32.totalorder %s287, %s288
      %p300 = scmp.eq.s32.totalorder %s33, 1
      %p301 = por %p299, %p300
      %p303 = scmp.ne.s32.totalorder %s288, %s302
      %p304 = scmp.eq.s32.totalorder %s33, 0
      %p305 = por %p303, %p304
      %s307 = sadd.s32 %s306, 1
      %p310 = scmp.eq.s32.totalorder %s27, 1
      %p311 = scmp.ne.s32.totalorder %s306, %s308
      %p312 = scmp.eq.s32.totalorder %s27, 0
      %p313 = por %p311, %p312
      %p314 = scmp.ne.s32.totalorder %s306, %s308
      %p315 = scmp.eq.s32.totalorder %s32, 1
      %p316 = por %p314, %p315
      %p317 = scmp.ne.s32.totalorder %s308, %s309
      %p318 = scmp.eq.s32.totalorder %s32, 0
      %p319 = por %p317, %p318
      %p320 = scmp.ne.s32.totalorder %s308, %s309
      %p321 = scmp.eq.s32.totalorder %s33, 1
      %p322 = por %p320, %p321
      %p324 = scmp.ne.s32.totalorder %s309, %s323
      %p325 = scmp.eq.s32.totalorder %s33, 0
      %p326 = por %p324, %p325
      %s327 = ssub.s32 %s34, %s46
      %p328 = scmp.eq.s32.totalorder %s327, 0
      %s330 = sadd.s32 %s329, 1
      %s331 = scalar_select %p328, %s329, %s330
      %p334 = pneg %p328
      %p335 = scmp.eq.s32.totalorder %s27, 1
      %p336 = por %p334, %p335
      %p337 = scmp.ne.s32.totalorder %s329, %s332
      %p338 = scmp.eq.s32.totalorder %s27, 0
      %p339 = por %p337, %p338
      %p340 = scmp.ne.s32.totalorder %s329, %s332
      %p341 = scmp.eq.s32.totalorder %s32, 1
      %p342 = por %p340, %p341
      %p343 = scmp.ne.s32.totalorder %s332, %s333
      %p344 = scmp.eq.s32.totalorder %s32, 0
      %p345 = por %p343, %p344
      %p346 = scmp.ne.s32.totalorder %s332, %s333
      %p347 = scmp.eq.s32.totalorder %s33, 1
      %p348 = por %p346, %p347
      %p350 = scmp.ne.s32.totalorder %s333, %s349
      %p351 = scmp.eq.s32.totalorder %s33, 0
      %p352 = por %p350, %p351
      %p353 = scmp.le.s32.totalorder 1, %s27
      %p354 = scmp.lt.s32.totalorder %s27, 3
      %p355 = pnand %p353, %p354
      %p356 = pneg %p355
      // Predicated region
      $region9: #{tpu_custom_call.1} parent=5 // pred_check
        _
      $region10: #{tpu_custom_call.1} parent=5 // pred_check_branch
        %358 = sbr.rel (%p355) target = $region12
      $region11: #{tpu_custom_call.1} parent=5 // pred_region
        %s359 = ssub.s32 %s27, 1
        // Predicated region
        $region13: #{tpu_custom_call.1} parent=11 // pred_check
          %p360 = pneg %p88
        $region14: #{tpu_custom_call.1} parent=11 // pred_check_branch
          %362 = sbr.rel (%p360) target = $region16
        $region15: #{tpu_custom_call.1} parent=11 // pred_region
          %364 = vsyncadd [#allocation10], 0
          %s365 = sshll.u32 %s1, 4
          %s366 = int_to_ptr.hbm [resolvable:$true] %s365
          %s367 = sshll.u32 [#allocation9], 4
          %s368 = int_to_ptr.vmem [resolvable:$true] %s367
          %373 = dma.hbm_to_vmem [thread:$0]  %s366, 2048, %s368, [#allocation10], 128, 128, 8
        $region16: #{tpu_custom_call.1} parent=11 // pred_fallthru
          _
        // Predicated region
        $region17: #{tpu_custom_call.1} parent=11 // pred_check
          %p374 = pneg %p109
        $region18: #{tpu_custom_call.1} parent=11 // pred_check_branch
          %376 = sbr.rel (%p374) target = $region20
        $region19: #{tpu_custom_call.1} parent=11 // pred_region
          %378 = vsyncadd [#allocation10], 0
          %s379 = sshll.u32 %s2, 4
          %s380 = int_to_ptr.hbm [resolvable:$true] %s379
          %s381 = sshll.u32 [#allocation11], 4
          %s382 = int_to_ptr.vmem [resolvable:$true] %s381
          %387 = dma.hbm_to_vmem [thread:$0]  %s380, 2048, %s382, [#allocation10], 128, 128, 8
        $region20: #{tpu_custom_call.1} parent=11 // pred_fallthru
          _
        // Predicated region
        $region21: #{tpu_custom_call.1} parent=11 // pred_check
          %p388 = pneg %p130
        $region22: #{tpu_custom_call.1} parent=11 // pred_check_branch
          %390 = sbr.rel (%p388) target = $region24
        $region23: #{tpu_custom_call.1} parent=11 // pred_region
          %392 = vsyncadd [#allocation13], 0
          %s393 = sshll.u32 %s3, 4
          %s394 = int_to_ptr.hbm [resolvable:$true] %s393
          %s395 = sshll.u32 [#allocation12], 4
          %s396 = int_to_ptr.vmem [resolvable:$true] %s395
          %401 = dma.hbm_to_vmem [thread:$0]  %s394, 2048, %s396, [#allocation13], 128, 128, 8
        $region24: #{tpu_custom_call.1} parent=11 // pred_fallthru
          _
        // Predicated region
        $region25: #{tpu_custom_call.1} parent=11 // pred_check
          %p402 = pneg %p151
        $region26: #{tpu_custom_call.1} parent=11 // pred_check_branch
          %404 = sbr.rel (%p402) target = $region28
        $region27: #{tpu_custom_call.1} parent=11 // pred_region
          %406 = vsyncadd [#allocation13], 0
          %s407 = sshll.u32 %s4, 4
          %s408 = int_to_ptr.hbm [resolvable:$true] %s407
          %s409 = sshll.u32 [#allocation14], 4
          %s410 = int_to_ptr.vmem [resolvable:$true] %s409
          %415 = dma.hbm_to_vmem [thread:$0]  %s408, 2048, %s410, [#allocation13], 128, 128, 8
        $region28: #{tpu_custom_call.1} parent=11 // pred_fallthru
          _
        // Predicated region
        $region29: #{tpu_custom_call.1} parent=11 // pred_check
          %p416 = pneg %p172
        $region30: #{tpu_custom_call.1} parent=11 // pred_check_branch
          %418 = sbr.rel (%p416) target = $region32
        $region31: #{tpu_custom_call.1} parent=11 // pred_region
          %420 = vsyncadd [#allocation16], 0
          %s421 = sshll.u32 %s5, 4
          %s422 = int_to_ptr.hbm [resolvable:$true] %s421
          %s423 = sshll.u32 [#allocation15], 4
          %s424 = int_to_ptr.vmem [resolvable:$true] %s423
          %429 = dma.hbm_to_vmem [thread:$0]  %s422, 2048, %s424, [#allocation16], 128, 128, 8
        $region32: #{tpu_custom_call.1} parent=11 // pred_fallthru
          _
        // Predicated region
        $region33: #{tpu_custom_call.1} parent=11 // pred_check
          %p430 = pneg %p193
        $region34: #{tpu_custom_call.1} parent=11 // pred_check_branch
          %432 = sbr.rel (%p430) target = $region36
        $region35: #{tpu_custom_call.1} parent=11 // pred_region
          %434 = vsyncadd [#allocation16], 0
          %s435 = sshll.u32 %s6, 4
          %s436 = int_to_ptr.hbm [resolvable:$true] %s435
          %s437 = sshll.u32 [#allocation17], 4
          %s438 = int_to_ptr.vmem [resolvable:$true] %s437
          %443 = dma.hbm_to_vmem [thread:$0]  %s436, 2048, %s438, [#allocation16], 128, 128, 8
        $region36: #{tpu_custom_call.1} parent=11 // pred_fallthru
          _
        // Predicated region
        $region37: #{tpu_custom_call.1} parent=11 // pred_check
          %p444 = pneg %p214
        $region38: #{tpu_custom_call.1} parent=11 // pred_check_branch
          %446 = sbr.rel (%p444) target = $region40
        $region39: #{tpu_custom_call.1} parent=11 // pred_region
          _
        $region40: #{tpu_custom_call.1} parent=11 // pred_fallthru
          _
        // Predicated region
        $region41: #{tpu_custom_call.1} parent=11 // pred_check
          %p447 = pneg %p235
        $region42: #{tpu_custom_call.1} parent=11 // pred_check_branch
          %449 = sbr.rel (%p447) target = $region44
        $region43: #{tpu_custom_call.1} parent=11 // pred_region
          _
        $region44: #{tpu_custom_call.1} parent=11 // pred_fallthru
          _
        // Predicated region
        $region45: #{tpu_custom_call.1} parent=11 // pred_check
          %p450 = pneg %p256
        $region46: #{tpu_custom_call.1} parent=11 // pred_check_branch
          %452 = sbr.rel (%p450) target = $region48
        $region47: #{tpu_custom_call.1} parent=11 // pred_region
          _
        $region48: #{tpu_custom_call.1} parent=11 // pred_fallthru
          _
        // Predicated region
        $region49: #{tpu_custom_call.1} parent=11 // pred_check
          %p453 = pneg %p277
        $region50: #{tpu_custom_call.1} parent=11 // pred_check_branch
          %455 = sbr.rel (%p453) target = $region52
        $region51: #{tpu_custom_call.1} parent=11 // pred_region
          _
        $region52: #{tpu_custom_call.1} parent=11 // pred_fallthru
          _
        // Predicated region
        $region53: #{tpu_custom_call.1} parent=11 // pred_check
          %p456 = pneg %p298
        $region54: #{tpu_custom_call.1} parent=11 // pred_check_branch
          %458 = sbr.rel (%p456) target = $region56
        $region55: #{tpu_custom_call.1} parent=11 // pred_region
          %460 = vsyncadd [#allocation19], 0
          %s461 = sshll.u32 %s11, 4
          %s462 = int_to_ptr.hbm [resolvable:$true] %s461
          %s463 = sshll.u32 [#allocation18], 4
          %s464 = int_to_ptr.vmem [resolvable:$true] %s463
          %469 = dma.hbm_to_vmem [thread:$0]  %s462, 2048, %s464, [#allocation19], 128, 128, 8
        $region56: #{tpu_custom_call.1} parent=11 // pred_fallthru
          _
        // Predicated region
        $region57: #{tpu_custom_call.1} parent=11 // pred_check
          %p470 = pneg %p319
        $region58: #{tpu_custom_call.1} parent=11 // pred_check_branch
          %472 = sbr.rel (%p470) target = $region60
        $region59: #{tpu_custom_call.1} parent=11 // pred_region
          _
        $region60: #{tpu_custom_call.1} parent=11 // pred_fallthru
          _
      $region12: #{tpu_custom_call.1} parent=5 // pred_fallthru
        _
      %p473 = scmp.lt.s32.totalorder %s27, 2
      // Predicated region
      $region61: #{tpu_custom_call.1} parent=5 // pred_check
        %p474 = pneg %p473
      $region62: #{tpu_custom_call.1} parent=5 // pred_check_branch
        %476 = sbr.rel (%p474) target = $region64
      $region63: #{tpu_custom_call.1} parent=5 // pred_region
        // Predicated region
        $region65: #{tpu_custom_call.1} parent=63 // pred_check
          %p477 = pneg %p61
        $region66: #{tpu_custom_call.1} parent=63 // pred_check_branch
          %479 = sbr.rel (%p477) target = $region68
        $region67: #{tpu_custom_call.1} parent=63 // pred_region
          %s480 = sand.u32 %s51, 1
          %s481 = scalar_lea.sflag [#allocation7], %s480
          %s482 = sand.u32 %s51, 1
          %s483 = smul.addr %s482, 32
          %s484 = scalar_lea.vmem [#allocation6], %s483
          %s485 = smul.u32 4, %s35
          %487 = vsyncadd %s481, 0
          %s488 = sadd.s32 %s34, %s485
          %s489 = smul.addr %s488, 8
          %s490 = scalar_lea.hbm %s0, %s489
          %s491 = sshll.u32 %s490, 4
          %s492 = int_to_ptr.hbm [resolvable:$true] %s491
          %s493 = sshll.u32 %s484, 4
          %s494 = int_to_ptr.vmem [resolvable:$true] %s493
          %499 = dma.hbm_to_vmem [thread:$0]  %s492, 512, %s494, %s481, 128, 128, 8
        $region68: #{tpu_custom_call.1} parent=63 // pred_fallthru
          _
      $region64: #{tpu_custom_call.1} parent=5 // pred_fallthru
        _
      %p500 = scmp.le.s32.totalorder 1, %s27
      %p501 = scmp.lt.s32.totalorder %s27, 3
      %p502 = pnand %p500, %p501
      %p503 = pneg %p502
      // Predicated region
      $region69: #{tpu_custom_call.1} parent=5 // pred_check
        _
      $region70: #{tpu_custom_call.1} parent=5 // pred_check_branch
        %505 = sbr.rel (%p502) target = $region72
      $region71: #{tpu_custom_call.1} parent=5 // pred_region
        %s506 = ssub.s32 %s27, 1
        %s507 = sand.u32 %s54, 1
        %s508 = scalar_lea.sflag [#allocation7], %s507
        %s509 = sand.u32 %s54, 1
        %s510 = smul.addr %s509, 32
        %s511 = scalar_lea.vmem [#allocation6], %s510
        // Predicated region
        $region73: #{tpu_custom_call.1} parent=71 // pred_check
          %p512 = pneg %p67
        $region74: #{tpu_custom_call.1} parent=71 // pred_check_branch
          %514 = sbr.rel (%p512) target = $region76
        $region75: #{tpu_custom_call.1} parent=71 // pred_region
          %516 = dma.done %s508, 512
        $region76: #{tpu_custom_call.1} parent=71 // pred_fallthru
          _
        // Predicated region
        $region77: #{tpu_custom_call.1} parent=71 // pred_check
          %p517 = pneg %p88
        $region78: #{tpu_custom_call.1} parent=71 // pred_check_branch
          %519 = sbr.rel (%p517) target = $region80
        $region79: #{tpu_custom_call.1} parent=71 // pred_region
          %521 = dma.done [#allocation10], 2048
        $region80: #{tpu_custom_call.1} parent=71 // pred_fallthru
          _
        // Predicated region
        $region81: #{tpu_custom_call.1} parent=71 // pred_check
          %p522 = pneg %p109
        $region82: #{tpu_custom_call.1} parent=71 // pred_check_branch
          %524 = sbr.rel (%p522) target = $region84
        $region83: #{tpu_custom_call.1} parent=71 // pred_region
          %526 = dma.done [#allocation10], 2048
        $region84: #{tpu_custom_call.1} parent=71 // pred_fallthru
          _
        // Predicated region
        $region85: #{tpu_custom_call.1} parent=71 // pred_check
          %p527 = pneg %p130
        $region86: #{tpu_custom_call.1} parent=71 // pred_check_branch
          %529 = sbr.rel (%p527) target = $region88
        $region87: #{tpu_custom_call.1} parent=71 // pred_region
          %531 = dma.done [#allocation13], 2048
        $region88: #{tpu_custom_call.1} parent=71 // pred_fallthru
          _
        // Predicated region
        $region89: #{tpu_custom_call.1} parent=71 // pred_check
          %p532 = pneg %p151
        $region90: #{tpu_custom_call.1} parent=71 // pred_check_branch
          %534 = sbr.rel (%p532) target = $region92
        $region91: #{tpu_custom_call.1} parent=71 // pred_region
          %536 = dma.done [#allocation13], 2048
        $region92: #{tpu_custom_call.1} parent=71 // pred_fallthru
          _
        // Predicated region
        $region93: #{tpu_custom_call.1} parent=71 // pred_check
          %p537 = pneg %p172
        $region94: #{tpu_custom_call.1} parent=71 // pred_check_branch
          %539 = sbr.rel (%p537) target = $region96
        $region95: #{tpu_custom_call.1} parent=71 // pred_region
          %541 = dma.done [#allocation16], 2048
        $region96: #{tpu_custom_call.1} parent=71 // pred_fallthru
          _
        // Predicated region
        $region97: #{tpu_custom_call.1} parent=71 // pred_check
          %p542 = pneg %p193
        $region98: #{tpu_custom_call.1} parent=71 // pred_check_branch
          %544 = sbr.rel (%p542) target = $region100
        $region99: #{tpu_custom_call.1} parent=71 // pred_region
          %546 = dma.done [#allocation16], 2048
        $region100: #{tpu_custom_call.1} parent=71 // pred_fallthru
          _
        // Predicated region
        $region101: #{tpu_custom_call.1} parent=71 // pred_check
          %p547 = pneg %p298
        $region102: #{tpu_custom_call.1} parent=71 // pred_check_branch
          %549 = sbr.rel (%p547) target = $region104
        $region103: #{tpu_custom_call.1} parent=71 // pred_region
          %551 = dma.done [#allocation19], 2048
        $region104: #{tpu_custom_call.1} parent=71 // pred_fallthru
          _
        %s552 = sand.u32 %s54, 1
        %s553 = scalar_lea.sflag [#allocation7], %s552
        %s554 = sand.u32 %s54, 1
        %s555 = smul.addr %s554, 32
        %s556 = scalar_lea.vmem [#allocation6], %s555
        %p557 = pneg %p67
        %p558 = pneg %p64
        %p559 = pneg %p88
        %p560 = pneg %p85
        %p561 = pneg %p109
        %p562 = pneg %p106
        %p563 = pneg %p130
        %p564 = pneg %p127
        %p565 = pneg %p151
        %p566 = pneg %p148
        %p567 = pneg %p172
        %p568 = pneg %p169
        %p569 = pneg %p193
        %p570 = pneg %p190
        %p571 = pneg %p214
        %p572 = pneg %p211
        %p573 = pneg %p235
        %p574 = pneg %p232
        %p575 = pneg %p256
        %p576 = pneg %p253
        %p577 = pneg %p277
        %p578 = pneg %p274
        %p579 = pneg %p298
        %p580 = pneg %p295
        %p581 = pneg %p319
        %p582 = pneg %p316
        %p583 = pneg %p345
        %p584 = pneg %p342
        %s585 = smul.u32 4, %s37
        %p586 = scmp.eq.s32.totalorder %s37, 0
        // Predicated region
        $region105: #{tpu_custom_call.1} parent=71 // pred_check
          %p587 = pneg %p586
        $region106: #{tpu_custom_call.1} parent=71 // pred_check_branch
          %589 = sbr.rel (%p587) target = $region108
        $region107: #{tpu_custom_call.1} parent=71 // pred_region
          %590 = vst [vmem:[#allocation2] sm:$0xff] 0.0
        $region108: #{tpu_custom_call.1} parent=71 // pred_fallthru
          _
        %v591 = vld [vmem:[%s511] sm:$0xff]
        %v592 = vld [vmem:[%s511 + $0x8] sm:$0xff]
        %v593 = vld [vmem:[%s511 + $0x10] sm:$0xff]
        %v594 = vld [vmem:[%s511 + $0x18] sm:$0xff]
        %v595 = vld [vmem:[#allocation9] sm:$0xff]
        %v596 = vld [vmem:[#allocation9 + $0x8] sm:$0xff]
        %v597 = vld [vmem:[#allocation9 + $0x10] sm:$0xff]
        %v598 = vld [vmem:[#allocation9 + $0x18] sm:$0xff]
        %v599 = vld [vmem:[#allocation9 + $0x20] sm:$0xff]
        %v600 = vld [vmem:[#allocation9 + $0x28] sm:$0xff]
        %v601 = vld [vmem:[#allocation9 + $0x30] sm:$0xff]
        %v602 = vld [vmem:[#allocation9 + $0x38] sm:$0xff]
        %v603 = vld [vmem:[#allocation9 + $0x40] sm:$0xff]
        %v604 = vld [vmem:[#allocation9 + $0x48] sm:$0xff]
        %v605 = vld [vmem:[#allocation9 + $0x50] sm:$0xff]
        %v606 = vld [vmem:[#allocation9 + $0x58] sm:$0xff]
        %v607 = vld [vmem:[#allocation9 + $0x60] sm:$0xff]
        %v608 = vld [vmem:[#allocation9 + $0x68] sm:$0xff]
        %v609 = vld [vmem:[#allocation9 + $0x70] sm:$0xff]
        %v610 = vld [vmem:[#allocation9 + $0x78] sm:$0xff]
        %v611 = vld [vmem:[%s7] sm:$0x1]
        %v613 = vperm.slane %v611, 0
        %615 = vmatpush.msra.mxu0 %v610
        %616 = vmatpush.msra.mxu0 %v609
        %617 = vmatpush.msra.mxu0 %v608
        %618 = vmatpush.msra.mxu0 %v607
        %619 = vmatpush.msra.mxu0 %v606
        %620 = vmatpush.msra.mxu0 %v605
        %621 = vmatpush.msra.mxu0 %v604
        %622 = vmatpush.msra.mxu0 %v603
        %623 = vmatpush.msra.mxu0 %v602
        %624 = vmatpush.msra.mxu0 %v601
        %625 = vmatpush.msra.mxu0 %v600
        %626 = vmatpush.msra.mxu0 %v599
        %627 = vmatpush.msra.mxu0 %v598
        %628 = vmatpush.msra.mxu0 %v597
        %629 = vmatpush.msra.mxu0 %v596
        %630 = vmatpush.msra.mxu0 %v595
        %631 = vmatmul.f32.gmra.mxu0 %v591
        %v632 = vpop.f32.mrf.mxu0
        %v633 = vadd.f32 %v613, %v632
        %634 = vmatmul.f32.gmra.mxu0 %v592
        %v635 = vpop.f32.mrf.mxu0
        %v636 = vadd.f32 %v613, %v635
        %637 = vmatmul.f32.gmra.mxu0 %v593
        %v638 = vpop.f32.mrf.mxu0
        %v639 = vadd.f32 %v613, %v638
        %640 = vmatmul.f32.gmra.mxu0 %v594
        %v641 = vpop.f32.mrf.mxu0
        %v642 = vadd.f32 %v613, %v641
        %643 = vdwg.mxu0
        %644 = vst [vmem:[#allocation3] sm:$0xff] %v633
        %645 = vst [vmem:[#allocation3 + $0x8] sm:$0xff] %v636
        %646 = vst [vmem:[#allocation3 + $0x10] sm:$0xff] %v639
        %647 = vst [vmem:[#allocation3 + $0x18] sm:$0xff] %v642
        %v648 = vld [vmem:[#allocation11] sm:$0xff]
        %v649 = vld [vmem:[#allocation11 + $0x8] sm:$0xff]
        %v650 = vld [vmem:[#allocation11 + $0x10] sm:$0xff]
        %v651 = vld [vmem:[#allocation11 + $0x18] sm:$0xff]
        %v652 = vld [vmem:[#allocation11 + $0x20] sm:$0xff]
        %v653 = vld [vmem:[#allocation11 + $0x28] sm:$0xff]
        %v654 = vld [vmem:[#allocation11 + $0x30] sm:$0xff]
        %v655 = vld [vmem:[#allocation11 + $0x38] sm:$0xff]
        %v656 = vld [vmem:[#allocation11 + $0x40] sm:$0xff]
        %v657 = vld [vmem:[#allocation11 + $0x48] sm:$0xff]
        %v658 = vld [vmem:[#allocation11 + $0x50] sm:$0xff]
        %v659 = vld [vmem:[#allocation11 + $0x58] sm:$0xff]
        %v660 = vld [vmem:[#allocation11 + $0x60] sm:$0xff]
        %v661 = vld [vmem:[#allocation11 + $0x68] sm:$0xff]
        %v662 = vld [vmem:[#allocation11 + $0x70] sm:$0xff]
        %v663 = vld [vmem:[#allocation11 + $0x78] sm:$0xff]
        %v664 = vld [vmem:[%s8] sm:$0x1]
        %v666 = vperm.slane %v664, 0
        %668 = vmatpush.msra.mxu0 %v663
        %669 = vmatpush.msra.mxu0 %v662
        %670 = vmatpush.msra.mxu0 %v661
        %671 = vmatpush.msra.mxu0 %v660
        %672 = vmatpush.msra.mxu0 %v659
        %673 = vmatpush.msra.mxu0 %v658
        %674 = vmatpush.msra.mxu0 %v657
        %675 = vmatpush.msra.mxu0 %v656
        %676 = vmatpush.msra.mxu0 %v655
        %677 = vmatpush.msra.mxu0 %v654
        %678 = vmatpush.msra.mxu0 %v653
        %679 = vmatpush.msra.mxu0 %v652
        %680 = vmatpush.msra.mxu0 %v651
        %681 = vmatpush.msra.mxu0 %v650
        %682 = vmatpush.msra.mxu0 %v649
        %683 = vmatpush.msra.mxu0 %v648
        %684 = vmatmul.f32.gmra.mxu0 %v591
        %v685 = vpop.f32.mrf.mxu0
        %v686 = vadd.f32 %v666, %v685
        %687 = vmatmul.f32.gmra.mxu0 %v592
        %v688 = vpop.f32.mrf.mxu0
        %v689 = vadd.f32 %v666, %v688
        %690 = vmatmul.f32.gmra.mxu0 %v593
        %v691 = vpop.f32.mrf.mxu0
        %v692 = vadd.f32 %v666, %v691
        %693 = vmatmul.f32.gmra.mxu0 %v594
        %v694 = vpop.f32.mrf.mxu0
        %v695 = vadd.f32 %v666, %v694
        %696 = vdwg.mxu0
        %697 = vst [vmem:[#allocation4] sm:$0xff] %v686
        %698 = vst [vmem:[#allocation4 + $0x8] sm:$0xff] %v689
        %699 = vst [vmem:[#allocation4 + $0x10] sm:$0xff] %v692
        %700 = vst [vmem:[#allocation4 + $0x18] sm:$0xff] %v695
        %v701 = vld [vmem:[#allocation12] sm:$0xff]
        %v702 = vld [vmem:[#allocation12 + $0x8] sm:$0xff]
        %v703 = vld [vmem:[#allocation12 + $0x10] sm:$0xff]
        %v704 = vld [vmem:[#allocation12 + $0x18] sm:$0xff]
        %v705 = vld [vmem:[#allocation12 + $0x20] sm:$0xff]
        %v706 = vld [vmem:[#allocation12 + $0x28] sm:$0xff]
        %v707 = vld [vmem:[#allocation12 + $0x30] sm:$0xff]
        %v708 = vld [vmem:[#allocation12 + $0x38] sm:$0xff]
        %v709 = vld [vmem:[#allocation12 + $0x40] sm:$0xff]
        %v710 = vld [vmem:[#allocation12 + $0x48] sm:$0xff]
        %v711 = vld [vmem:[#allocation12 + $0x50] sm:$0xff]
        %v712 = vld [vmem:[#allocation12 + $0x58] sm:$0xff]
        %v713 = vld [vmem:[#allocation12 + $0x60] sm:$0xff]
        %v714 = vld [vmem:[#allocation12 + $0x68] sm:$0xff]
        %v715 = vld [vmem:[#allocation12 + $0x70] sm:$0xff]
        %v716 = vld [vmem:[#allocation12 + $0x78] sm:$0xff]
        %v717 = vld [vmem:[%s9] sm:$0x1]
        %v719 = vperm.slane %v717, 0
        %721 = vmatpush.msra.mxu0 %v716
        %722 = vmatpush.msra.mxu0 %v715
        %723 = vmatpush.msra.mxu0 %v714
        %724 = vmatpush.msra.mxu0 %v713
        %725 = vmatpush.msra.mxu0 %v712
        %726 = vmatpush.msra.mxu0 %v711
        %727 = vmatpush.msra.mxu0 %v710
        %728 = vmatpush.msra.mxu0 %v709
        %729 = vmatpush.msra.mxu0 %v708
        %730 = vmatpush.msra.mxu0 %v707
        %731 = vmatpush.msra.mxu0 %v706
        %732 = vmatpush.msra.mxu0 %v705
        %733 = vmatpush.msra.mxu0 %v704
        %734 = vmatpush.msra.mxu0 %v703
        %735 = vmatpush.msra.mxu0 %v702
        %736 = vmatpush.msra.mxu0 %v701
        %737 = vmatmul.f32.gmra.mxu0 %v591
        %v738 = vpop.f32.mrf.mxu0
        %v739 = vadd.f32 %v719, %v738
        %740 = vmatmul.f32.gmra.mxu0 %v592
        %v741 = vpop.f32.mrf.mxu0
        %v742 = vadd.f32 %v719, %v741
        %743 = vmatmul.f32.gmra.mxu0 %v593
        %v744 = vpop.f32.mrf.mxu0
        %v745 = vadd.f32 %v719, %v744
        %746 = vmatmul.f32.gmra.mxu0 %v594
        %v747 = vpop.f32.mrf.mxu0
        %v748 = vadd.f32 %v719, %v747
        %749 = vdwg.mxu0
        %750 = vst [vmem:[#allocation5] sm:$0xff] %v739
        %751 = vst [vmem:[#allocation5 + $0x8] sm:$0xff] %v742
        %752 = vst [vmem:[#allocation5 + $0x10] sm:$0xff] %v745
        %753 = vst [vmem:[#allocation5 + $0x18] sm:$0xff] %v748
        %v754 = vld [vmem:[%s10] sm:$0x1]
        %v756 = vperm.slane %v754, 0
        %v758 = vld [vmem:[#allocation2] sm:$0xff]
        %v759 = vld [vmem:[#allocation14] sm:$0xff]
        %v760 = vld [vmem:[#allocation14 + $0x8] sm:$0xff]
        %v761 = vld [vmem:[#allocation14 + $0x10] sm:$0xff]
        %v762 = vld [vmem:[#allocation14 + $0x18] sm:$0xff]
        %v763 = vld [vmem:[#allocation14 + $0x20] sm:$0xff]
        %v764 = vld [vmem:[#allocation14 + $0x28] sm:$0xff]
        %v765 = vld [vmem:[#allocation14 + $0x30] sm:$0xff]
        %v766 = vld [vmem:[#allocation14 + $0x38] sm:$0xff]
        %v767 = vld [vmem:[#allocation14 + $0x40] sm:$0xff]
        %v768 = vld [vmem:[#allocation14 + $0x48] sm:$0xff]
        %v769 = vld [vmem:[#allocation14 + $0x50] sm:$0xff]
        %v770 = vld [vmem:[#allocation14 + $0x58] sm:$0xff]
        %v771 = vld [vmem:[#allocation14 + $0x60] sm:$0xff]
        %v772 = vld [vmem:[#allocation14 + $0x68] sm:$0xff]
        %v773 = vld [vmem:[#allocation14 + $0x70] sm:$0xff]
        %v774 = vld [vmem:[#allocation14 + $0x78] sm:$0xff]
        %775 = vmatpush.msra.mxu0 %v774
        %776 = vmatpush.msra.mxu0 %v773
        %777 = vmatpush.msra.mxu0 %v772
        %778 = vmatpush.msra.mxu0 %v771
        %779 = vmatpush.msra.mxu0 %v770
        %780 = vmatpush.msra.mxu0 %v769
        %781 = vmatpush.msra.mxu0 %v768
        %782 = vmatpush.msra.mxu0 %v767
        %783 = vmatpush.msra.mxu0 %v766
        %784 = vmatpush.msra.mxu0 %v765
        %785 = vmatpush.msra.mxu0 %v764
        %786 = vmatpush.msra.mxu0 %v763
        %787 = vmatpush.msra.mxu0 %v762
        %788 = vmatpush.msra.mxu0 %v761
        %789 = vmatpush.msra.mxu0 %v760
        %790 = vmatpush.msra.mxu0 %v759
        %791 = vmatmul.f32.gmra.mxu0 %v758
        %v792 = vpop.f32.mrf.mxu0
        %v793 = vadd.f32 0.0, %v792
        %794 = vdwg.mxu0
        %v795 = vld [vmem:[#allocation15] sm:$0xff]
        %v796 = vld [vmem:[#allocation15 + $0x8] sm:$0xff]
        %v797 = vld [vmem:[#allocation15 + $0x10] sm:$0xff]
        %v798 = vld [vmem:[#allocation15 + $0x18] sm:$0xff]
        %v799 = vld [vmem:[#allocation15 + $0x20] sm:$0xff]
        %v800 = vld [vmem:[#allocation15 + $0x28] sm:$0xff]
        %v801 = vld [vmem:[#allocation15 + $0x30] sm:$0xff]
        %v802 = vld [vmem:[#allocation15 + $0x38] sm:$0xff]
        %v803 = vld [vmem:[#allocation15 + $0x40] sm:$0xff]
        %v804 = vld [vmem:[#allocation15 + $0x48] sm:$0xff]
        %v805 = vld [vmem:[#allocation15 + $0x50] sm:$0xff]
        %v806 = vld [vmem:[#allocation15 + $0x58] sm:$0xff]
        %v807 = vld [vmem:[#allocation15 + $0x60] sm:$0xff]
        %v808 = vld [vmem:[#allocation15 + $0x68] sm:$0xff]
        %v809 = vld [vmem:[#allocation15 + $0x70] sm:$0xff]
        %v810 = vld [vmem:[#allocation15 + $0x78] sm:$0xff]
        %811 = vmatpush.msra.mxu0 %v810
        %812 = vmatpush.msra.mxu0 %v809
        %813 = vmatpush.msra.mxu0 %v808
        %814 = vmatpush.msra.mxu0 %v807
        %815 = vmatpush.msra.mxu0 %v806
        %816 = vmatpush.msra.mxu0 %v805
        %817 = vmatpush.msra.mxu0 %v804
        %818 = vmatpush.msra.mxu0 %v803
        %819 = vmatpush.msra.mxu0 %v802
        %820 = vmatpush.msra.mxu0 %v801
        %821 = vmatpush.msra.mxu0 %v800
        %822 = vmatpush.msra.mxu0 %v799
        %823 = vmatpush.msra.mxu0 %v798
        %824 = vmatpush.msra.mxu0 %v797
        %825 = vmatpush.msra.mxu0 %v796
        %826 = vmatpush.msra.mxu0 %v795
        %827 = vmatmul.f32.gmra.mxu0 %v758
        %v828 = vpop.f32.mrf.mxu0
        %v829 = vadd.f32 0.0, %v828
        %830 = vdwg.mxu0
        %v831 = vld [vmem:[#allocation17] sm:$0xff]
        %v832 = vld [vmem:[#allocation17 + $0x8] sm:$0xff]
        %v833 = vld [vmem:[#allocation17 + $0x10] sm:$0xff]
        %v834 = vld [vmem:[#allocation17 + $0x18] sm:$0xff]
        %v835 = vld [vmem:[#allocation17 + $0x20] sm:$0xff]
        %v836 = vld [vmem:[#allocation17 + $0x28] sm:$0xff]
        %v837 = vld [vmem:[#allocation17 + $0x30] sm:$0xff]
        %v838 = vld [vmem:[#allocation17 + $0x38] sm:$0xff]
        %v839 = vld [vmem:[#allocation17 + $0x40] sm:$0xff]
        %v840 = vld [vmem:[#allocation17 + $0x48] sm:$0xff]
        %v841 = vld [vmem:[#allocation17 + $0x50] sm:$0xff]
        %v842 = vld [vmem:[#allocation17 + $0x58] sm:$0xff]
        %v843 = vld [vmem:[#allocation17 + $0x60] sm:$0xff]
        %v844 = vld [vmem:[#allocation17 + $0x68] sm:$0xff]
        %v845 = vld [vmem:[#allocation17 + $0x70] sm:$0xff]
        %v846 = vld [vmem:[#allocation17 + $0x78] sm:$0xff]
        %847 = vmatpush.msra.mxu0 %v846
        %848 = vmatpush.msra.mxu0 %v845
        %849 = vmatpush.msra.mxu0 %v844
        %850 = vmatpush.msra.mxu0 %v843
        %851 = vmatpush.msra.mxu0 %v842
        %852 = vmatpush.msra.mxu0 %v841
        %853 = vmatpush.msra.mxu0 %v840
        %854 = vmatpush.msra.mxu0 %v839
        %855 = vmatpush.msra.mxu0 %v838
        %856 = vmatpush.msra.mxu0 %v837
        %857 = vmatpush.msra.mxu0 %v836
        %858 = vmatpush.msra.mxu0 %v835
        %859 = vmatpush.msra.mxu0 %v834
        %860 = vmatpush.msra.mxu0 %v833
        %861 = vmatpush.msra.mxu0 %v832
        %862 = vmatpush.msra.mxu0 %v831
        %863 = vmatmul.f32.gmra.mxu0 %v758
        %v864 = vpop.f32.mrf.mxu0
        %v865 = vadd.f32 %v756, %v864
        %866 = vdwg.mxu0
        %v867 = vld [vmem:[#allocation3] sm:$0xff]
        %v868 = vadd.f32 %v867, %v793
        %v869 = vxor.u32 %v868, 2147483648
        %v870 = vmul.f32 %v869, 1.442695
        %v871 = vpow.pop %v870
        %v872 = vadd.f32 %v871, 1.0
        %v873 = vrcp.pop %v872
        %v874 = vmul.f32 %v872, %v873
        %v875 = vsub.f32 1.0, %v874
        %v876 = vmul.f32 %v873, %v875
        %v877 = vadd.f32 %v873, %v876
        %vm878 = vweird.f32 %v872
        %vm879 = vweird.f32 %v873
        %vm880 = vmor %vm878, %vm879
        %v881 = vsel %vm880, %v873, %v877
        %v882 = vand.u32 2147483647, %v872
        %vm883 = vcmp.eq.f32.partialorder %v882, 8.507059e+37
        %v884 = vand.u32 %v872, 2147483648
        %v885 = vor.u32 1.1754944e-38, %v884
        %v886 = vsel %vm883, %v885, %v881
        %v887 = vmul.f32 1.0, %v886
        %v888 = vld [vmem:[#allocation4] sm:$0xff]
        %v889 = vadd.f32 %v888, %v829
        %v890 = vxor.u32 %v889, 2147483648
        %v891 = vmul.f32 %v890, 1.442695
        %v892 = vpow.pop %v891
        %v893 = vadd.f32 %v892, 1.0
        %v894 = vrcp.pop %v893
        %v895 = vmul.f32 %v893, %v894
        %v896 = vsub.f32 1.0, %v895
        %v897 = vmul.f32 %v894, %v896
        %v898 = vadd.f32 %v894, %v897
        %vm899 = vweird.f32 %v893
        %vm900 = vweird.f32 %v894
        %vm901 = vmor %vm899, %vm900
        %v902 = vsel %vm901, %v894, %v898
        %v903 = vand.u32 2147483647, %v893
        %vm904 = vcmp.eq.f32.partialorder %v903, 8.507059e+37
        %v905 = vand.u32 %v893, 2147483648
        %v906 = vor.u32 1.1754944e-38, %v905
        %v907 = vsel %vm904, %v906, %v902
        %v908 = vmul.f32 1.0, %v907
        %v909 = vld [vmem:[#allocation5] sm:$0xff]
        %v910 = vmul.f32 %v887, %v865
        %v911 = vadd.f32 %v909, %v910
        %v912 = vtanh.pop %v911
        %v913 = vsub.f32 1.0, %v908
        %v914 = vmul.f32 %v913, %v912
        %v915 = vmul.f32 %v908, %v758
        %v916 = vadd.f32 %v914, %v915
        %917 = vmatpush.msra.mxu0 %v774
        %918 = vmatpush.msra.mxu0 %v773
        %919 = vmatpush.msra.mxu0 %v772
        %920 = vmatpush.msra.mxu0 %v771
        %921 = vmatpush.msra.mxu0 %v770
        %922 = vmatpush.msra.mxu0 %v769
        %923 = vmatpush.msra.mxu0 %v768
        %924 = vmatpush.msra.mxu0 %v767
        %925 = vmatpush.msra.mxu0 %v766
        %926 = vmatpush.msra.mxu0 %v765
        %927 = vmatpush.msra.mxu0 %v764
        %928 = vmatpush.msra.mxu0 %v763
        %929 = vmatpush.msra.mxu0 %v762
        %930 = vmatpush.msra.mxu0 %v761
        %931 = vmatpush.msra.mxu0 %v760
        %932 = vmatpush.msra.mxu0 %v759
        %933 = vmatmul.f32.gmra.mxu0 %v916
        %v934 = vpop.f32.mrf.mxu0
        %v935 = vadd.f32 0.0, %v934
        %936 = vdwg.mxu0
        %937 = vmatpush.msra.mxu0 %v810
        %938 = vmatpush.msra.mxu0 %v809
        %939 = vmatpush.msra.mxu0 %v808
        %940 = vmatpush.msra.mxu0 %v807
        %941 = vmatpush.msra.mxu0 %v806
        %942 = vmatpush.msra.mxu0 %v805
        %943 = vmatpush.msra.mxu0 %v804
        %944 = vmatpush.msra.mxu0 %v803
        %945 = vmatpush.msra.mxu0 %v802
        %946 = vmatpush.msra.mxu0 %v801
        %947 = vmatpush.msra.mxu0 %v800
        %948 = vmatpush.msra.mxu0 %v799
        %949 = vmatpush.msra.mxu0 %v798
        %950 = vmatpush.msra.mxu0 %v797
        %951 = vmatpush.msra.mxu0 %v796
        %952 = vmatpush.msra.mxu0 %v795
        %953 = vmatmul.f32.gmra.mxu0 %v916
        %v954 = vpop.f32.mrf.mxu0
        %v955 = vadd.f32 0.0, %v954
        %956 = vdwg.mxu0
        %957 = vmatpush.msra.mxu0 %v846
        %958 = vmatpush.msra.mxu0 %v845
        %959 = vmatpush.msra.mxu0 %v844
        %960 = vmatpush.msra.mxu0 %v843
        %961 = vmatpush.msra.mxu0 %v842
        %962 = vmatpush.msra.mxu0 %v841
        %963 = vmatpush.msra.mxu0 %v840
        %964 = vmatpush.msra.mxu0 %v839
        %965 = vmatpush.msra.mxu0 %v838
        %966 = vmatpush.msra.mxu0 %v837
        %967 = vmatpush.msra.mxu0 %v836
        %968 = vmatpush.msra.mxu0 %v835
        %969 = vmatpush.msra.mxu0 %v834
        %970 = vmatpush.msra.mxu0 %v833
        %971 = vmatpush.msra.mxu0 %v832
        %972 = vmatpush.msra.mxu0 %v831
        %973 = vmatmul.f32.gmra.mxu0 %v916
        %v974 = vpop.f32.mrf.mxu0
        %v975 = vadd.f32 %v756, %v974
        %976 = vdwg.mxu0
        %s977 = scalar_lea.vmem [#allocation3], 8
        %v978 = vld [vmem:[%s977] sm:$0xff]
        %v979 = vadd.f32 %v978, %v935
        %v980 = vxor.u32 %v979, 2147483648
        %v981 = vmul.f32 %v980, 1.442695
        %v982 = vpow.pop %v981
        %v983 = vadd.f32 %v982, 1.0
        %v984 = vrcp.pop %v983
        %v985 = vmul.f32 %v983, %v984
        %v986 = vsub.f32 1.0, %v985
        %v987 = vmul.f32 %v984, %v986
        %v988 = vadd.f32 %v984, %v987
        %vm989 = vweird.f32 %v983
        %vm990 = vweird.f32 %v984
        %vm991 = vmor %vm989, %vm990
        %v992 = vsel %vm991, %v984, %v988
        %v993 = vand.u32 2147483647, %v983
        %vm994 = vcmp.eq.f32.partialorder %v993, 8.507059e+37
        %v995 = vand.u32 %v983, 2147483648
        %v996 = vor.u32 1.1754944e-38, %v995
        %v997 = vsel %vm994, %v996, %v992
        %v998 = vmul.f32 1.0, %v997
        %s999 = scalar_lea.vmem [#allocation4], 8
        %v1000 = vld [vmem:[%s999] sm:$0xff]
        %v1001 = vadd.f32 %v1000, %v955
        %v1002 = vxor.u32 %v1001, 2147483648
        %v1003 = vmul.f32 %v1002, 1.442695
        %v1004 = vpow.pop %v1003
        %v1005 = vadd.f32 %v1004, 1.0
        %v1006 = vrcp.pop %v1005
        %v1007 = vmul.f32 %v1005, %v1006
        %v1008 = vsub.f32 1.0, %v1007
        %v1009 = vmul.f32 %v1006, %v1008
        %v1010 = vadd.f32 %v1006, %v1009
        %vm1011 = vweird.f32 %v1005
        %vm1012 = vweird.f32 %v1006
        %vm1013 = vmor %vm1011, %vm1012
        %v1014 = vsel %vm1013, %v1006, %v1010
        %v1015 = vand.u32 2147483647, %v1005
        %vm1016 = vcmp.eq.f32.partialorder %v1015, 8.507059e+37
        %v1017 = vand.u32 %v1005, 2147483648
        %v1018 = vor.u32 1.1754944e-38, %v1017
        %v1019 = vsel %vm1016, %v1018, %v1014
        %v1020 = vmul.f32 1.0, %v1019
        %s1021 = scalar_lea.vmem [#allocation5], 8
        %v1022 = vld [vmem:[%s1021] sm:$0xff]
        %v1023 = vmul.f32 %v998, %v975
        %v1024 = vadd.f32 %v1022, %v1023
        %v1025 = vtanh.pop %v1024
        %v1026 = vsub.f32 1.0, %v1020
        %v1027 = vmul.f32 %v1026, %v1025
        %v1028 = vmul.f32 %v1020, %v916
        %v1029 = vadd.f32 %v1027, %v1028
        %1030 = vmatpush.msra.mxu0 %v774
        %1031 = vmatpush.msra.mxu0 %v773
        %1032 = vmatpush.msra.mxu0 %v772
        %1033 = vmatpush.msra.mxu0 %v771
        %1034 = vmatpush.msra.mxu0 %v770
        %1035 = vmatpush.msra.mxu0 %v769
        %1036 = vmatpush.msra.mxu0 %v768
        %1037 = vmatpush.msra.mxu0 %v767
        %1038 = vmatpush.msra.mxu0 %v766
        %1039 = vmatpush.msra.mxu0 %v765
        %1040 = vmatpush.msra.mxu0 %v764
        %1041 = vmatpush.msra.mxu0 %v763
        %1042 = vmatpush.msra.mxu0 %v762
        %1043 = vmatpush.msra.mxu0 %v761
        %1044 = vmatpush.msra.mxu0 %v760
        %1045 = vmatpush.msra.mxu0 %v759
        %1046 = vmatmul.f32.gmra.mxu0 %v1029
        %v1047 = vpop.f32.mrf.mxu0
        %v1048 = vadd.f32 0.0, %v1047
        %1049 = vdwg.mxu0
        %1050 = vmatpush.msra.mxu0 %v810
        %1051 = vmatpush.msra.mxu0 %v809
        %1052 = vmatpush.msra.mxu0 %v808
        %1053 = vmatpush.msra.mxu0 %v807
        %1054 = vmatpush.msra.mxu0 %v806
        %1055 = vmatpush.msra.mxu0 %v805
        %1056 = vmatpush.msra.mxu0 %v804
        %1057 = vmatpush.msra.mxu0 %v803
        %1058 = vmatpush.msra.mxu0 %v802
        %1059 = vmatpush.msra.mxu0 %v801
        %1060 = vmatpush.msra.mxu0 %v800
        %1061 = vmatpush.msra.mxu0 %v799
        %1062 = vmatpush.msra.mxu0 %v798
        %1063 = vmatpush.msra.mxu0 %v797
        %1064 = vmatpush.msra.mxu0 %v796
        %1065 = vmatpush.msra.mxu0 %v795
        %1066 = vmatmul.f32.gmra.mxu0 %v1029
        %v1067 = vpop.f32.mrf.mxu0
        %v1068 = vadd.f32 0.0, %v1067
        %1069 = vdwg.mxu0
        %1070 = vmatpush.msra.mxu0 %v846
        %1071 = vmatpush.msra.mxu0 %v845
        %1072 = vmatpush.msra.mxu0 %v844
        %1073 = vmatpush.msra.mxu0 %v843
        %1074 = vmatpush.msra.mxu0 %v842
        %1075 = vmatpush.msra.mxu0 %v841
        %1076 = vmatpush.msra.mxu0 %v840
        %1077 = vmatpush.msra.mxu0 %v839
        %1078 = vmatpush.msra.mxu0 %v838
        %1079 = vmatpush.msra.mxu0 %v837
        %1080 = vmatpush.msra.mxu0 %v836
        %1081 = vmatpush.msra.mxu0 %v835
        %1082 = vmatpush.msra.mxu0 %v834
        %1083 = vmatpush.msra.mxu0 %v833
        %1084 = vmatpush.msra.mxu0 %v832
        %1085 = vmatpush.msra.mxu0 %v831
        %1086 = vmatmul.f32.gmra.mxu0 %v1029
        %v1087 = vpop.f32.mrf.mxu0
        %v1088 = vadd.f32 %v756, %v1087
        %1089 = vdwg.mxu0
        %s1090 = scalar_lea.vmem [#allocation3], 16
        %v1091 = vld [vmem:[%s1090] sm:$0xff]
        %v1092 = vadd.f32 %v1091, %v1048
        %v1093 = vxor.u32 %v1092, 2147483648
        %v1094 = vmul.f32 %v1093, 1.442695
        %v1095 = vpow.pop %v1094
        %v1096 = vadd.f32 %v1095, 1.0
        %v1097 = vrcp.pop %v1096
        %v1098 = vmul.f32 %v1096, %v1097
        %v1099 = vsub.f32 1.0, %v1098
        %v1100 = vmul.f32 %v1097, %v1099
        %v1101 = vadd.f32 %v1097, %v1100
        %vm1102 = vweird.f32 %v1096
        %vm1103 = vweird.f32 %v1097
        %vm1104 = vmor %vm1102, %vm1103
        %v1105 = vsel %vm1104, %v1097, %v1101
        %v1106 = vand.u32 2147483647, %v1096
        %vm1107 = vcmp.eq.f32.partialorder %v1106, 8.507059e+37
        %v1108 = vand.u32 %v1096, 2147483648
        %v1109 = vor.u32 1.1754944e-38, %v1108
        %v1110 = vsel %vm1107, %v1109, %v1105
        %v1111 = vmul.f32 1.0, %v1110
        %s1112 = scalar_lea.vmem [#allocation4], 16
        %v1113 = vld [vmem:[%s1112] sm:$0xff]
        %v1114 = vadd.f32 %v1113, %v1068
        %v1115 = vxor.u32 %v1114, 2147483648
        %v1116 = vmul.f32 %v1115, 1.442695
        %v1117 = vpow.pop %v1116
        %v1118 = vadd.f32 %v1117, 1.0
        %v1119 = vrcp.pop %v1118
        %v1120 = vmul.f32 %v1118, %v1119
        %v1121 = vsub.f32 1.0, %v1120
        %v1122 = vmul.f32 %v1119, %v1121
        %v1123 = vadd.f32 %v1119, %v1122
        %vm1124 = vweird.f32 %v1118
        %vm1125 = vweird.f32 %v1119
        %vm1126 = vmor %vm1124, %vm1125
        %v1127 = vsel %vm1126, %v1119, %v1123
        %v1128 = vand.u32 2147483647, %v1118
        %vm1129 = vcmp.eq.f32.partialorder %v1128, 8.507059e+37
        %v1130 = vand.u32 %v1118, 2147483648
        %v1131 = vor.u32 1.1754944e-38, %v1130
        %v1132 = vsel %vm1129, %v1131, %v1127
        %v1133 = vmul.f32 1.0, %v1132
        %s1134 = scalar_lea.vmem [#allocation5], 16
        %v1135 = vld [vmem:[%s1134] sm:$0xff]
        %v1136 = vmul.f32 %v1111, %v1088
        %v1137 = vadd.f32 %v1135, %v1136
        %v1138 = vtanh.pop %v1137
        %v1139 = vsub.f32 1.0, %v1133
        %v1140 = vmul.f32 %v1139, %v1138
        %v1141 = vmul.f32 %v1133, %v1029
        %v1142 = vadd.f32 %v1140, %v1141
        %1143 = vmatpush.msra.mxu0 %v774
        %1144 = vmatpush.msra.mxu0 %v773
        %1145 = vmatpush.msra.mxu0 %v772
        %1146 = vmatpush.msra.mxu0 %v771
        %1147 = vmatpush.msra.mxu0 %v770
        %1148 = vmatpush.msra.mxu0 %v769
        %1149 = vmatpush.msra.mxu0 %v768
        %1150 = vmatpush.msra.mxu0 %v767
        %1151 = vmatpush.msra.mxu0 %v766
        %1152 = vmatpush.msra.mxu0 %v765
        %1153 = vmatpush.msra.mxu0 %v764
        %1154 = vmatpush.msra.mxu0 %v763
        %1155 = vmatpush.msra.mxu0 %v762
        %1156 = vmatpush.msra.mxu0 %v761
        %1157 = vmatpush.msra.mxu0 %v760
        %1158 = vmatpush.msra.mxu0 %v759
        %1159 = vmatmul.f32.gmra.mxu0 %v1142
        %v1160 = vpop.f32.mrf.mxu0
        %v1161 = vadd.f32 0.0, %v1160
        %1162 = vdwg.mxu0
        %1163 = vmatpush.msra.mxu0 %v810
        %1164 = vmatpush.msra.mxu0 %v809
        %1165 = vmatpush.msra.mxu0 %v808
        %1166 = vmatpush.msra.mxu0 %v807
        %1167 = vmatpush.msra.mxu0 %v806
        %1168 = vmatpush.msra.mxu0 %v805
        %1169 = vmatpush.msra.mxu0 %v804
        %1170 = vmatpush.msra.mxu0 %v803
        %1171 = vmatpush.msra.mxu0 %v802
        %1172 = vmatpush.msra.mxu0 %v801
        %1173 = vmatpush.msra.mxu0 %v800
        %1174 = vmatpush.msra.mxu0 %v799
        %1175 = vmatpush.msra.mxu0 %v798
        %1176 = vmatpush.msra.mxu0 %v797
        %1177 = vmatpush.msra.mxu0 %v796
        %1178 = vmatpush.msra.mxu0 %v795
        %1179 = vmatmul.f32.gmra.mxu0 %v1142
        %v1180 = vpop.f32.mrf.mxu0
        %v1181 = vadd.f32 0.0, %v1180
        %1182 = vdwg.mxu0
        %1183 = vmatpush.msra.mxu0 %v846
        %1184 = vmatpush.msra.mxu0 %v845
        %1185 = vmatpush.msra.mxu0 %v844
        %1186 = vmatpush.msra.mxu0 %v843
        %1187 = vmatpush.msra.mxu0 %v842
        %1188 = vmatpush.msra.mxu0 %v841
        %1189 = vmatpush.msra.mxu0 %v840
        %1190 = vmatpush.msra.mxu0 %v839
        %1191 = vmatpush.msra.mxu0 %v838
        %1192 = vmatpush.msra.mxu0 %v837
        %1193 = vmatpush.msra.mxu0 %v836
        %1194 = vmatpush.msra.mxu0 %v835
        %1195 = vmatpush.msra.mxu0 %v834
        %1196 = vmatpush.msra.mxu0 %v833
        %1197 = vmatpush.msra.mxu0 %v832
        %1198 = vmatpush.msra.mxu0 %v831
        %1199 = vmatmul.f32.gmra.mxu0 %v1142
        %v1200 = vpop.f32.mrf.mxu0
        %v1201 = vadd.f32 %v756, %v1200
        %1202 = vdwg.mxu0
        %s1203 = scalar_lea.vmem [#allocation3], 24
        %v1204 = vld [vmem:[%s1203] sm:$0xff]
        %v1205 = vadd.f32 %v1204, %v1161
        %v1206 = vxor.u32 %v1205, 2147483648
        %v1207 = vmul.f32 %v1206, 1.442695
        %v1208 = vpow.pop %v1207
        %v1209 = vadd.f32 %v1208, 1.0
        %v1210 = vrcp.pop %v1209
        %v1211 = vmul.f32 %v1209, %v1210
        %v1212 = vsub.f32 1.0, %v1211
        %v1213 = vmul.f32 %v1210, %v1212
        %v1214 = vadd.f32 %v1210, %v1213
        %vm1215 = vweird.f32 %v1209
        %vm1216 = vweird.f32 %v1210
        %vm1217 = vmor %vm1215, %vm1216
        %v1218 = vsel %vm1217, %v1210, %v1214
        %v1219 = vand.u32 2147483647, %v1209
        %vm1220 = vcmp.eq.f32.partialorder %v1219, 8.507059e+37
        %v1221 = vand.u32 %v1209, 2147483648
        %v1222 = vor.u32 1.1754944e-38, %v1221
        %v1223 = vsel %vm1220, %v1222, %v1218
        %v1224 = vmul.f32 1.0, %v1223
        %s1225 = scalar_lea.vmem [#allocation4], 24
        %v1226 = vld [vmem:[%s1225] sm:$0xff]
        %v1227 = vadd.f32 %v1226, %v1181
        %v1228 = vxor.u32 %v1227, 2147483648
        %v1229 = vmul.f32 %v1228, 1.442695
        %v1230 = vpow.pop %v1229
        %v1231 = vadd.f32 %v1230, 1.0
        %v1232 = vrcp.pop %v1231
        %v1233 = vmul.f32 %v1231, %v1232
        %v1234 = vsub.f32 1.0, %v1233
        %v1235 = vmul.f32 %v1232, %v1234
        %v1236 = vadd.f32 %v1232, %v1235
        %vm1237 = vweird.f32 %v1231
        %vm1238 = vweird.f32 %v1232
        %vm1239 = vmor %vm1237, %vm1238
        %v1240 = vsel %vm1239, %v1232, %v1236
        %v1241 = vand.u32 2147483647, %v1231
        %vm1242 = vcmp.eq.f32.partialorder %v1241, 8.507059e+37
        %v1243 = vand.u32 %v1231, 2147483648
        %v1244 = vor.u32 1.1754944e-38, %v1243
        %v1245 = vsel %vm1242, %v1244, %v1240
        %v1246 = vmul.f32 1.0, %v1245
        %s1247 = scalar_lea.vmem [#allocation5], 24
        %v1248 = vld [vmem:[%s1247] sm:$0xff]
        %v1249 = vmul.f32 %v1224, %v1201
        %v1250 = vadd.f32 %v1248, %v1249
        %v1251 = vtanh.pop %v1250
        %v1252 = vsub.f32 1.0, %v1246
        %v1253 = vmul.f32 %v1252, %v1251
        %v1254 = vmul.f32 %v1246, %v1142
        %v1255 = vadd.f32 %v1253, %v1254
        %1256 = vst [vmem:[#allocation2] sm:$0xff] %v1255
        %p1257 = scmp.eq.s32.totalorder %s37, 1
        // Predicated region
        $region109: #{tpu_custom_call.1} parent=71 // pred_check
          %p1258 = pneg %p1257
        $region110: #{tpu_custom_call.1} parent=71 // pred_check_branch
          %1260 = sbr.rel (%p1258) target = $region112
        $region111: #{tpu_custom_call.1} parent=71 // pred_region
          %v1261 = vld [vmem:[#allocation18] sm:$0xff]
          %v1262 = vld [vmem:[#allocation18 + $0x8] sm:$0xff]
          %v1263 = vld [vmem:[#allocation18 + $0x10] sm:$0xff]
          %v1264 = vld [vmem:[#allocation18 + $0x18] sm:$0xff]
          %v1265 = vld [vmem:[#allocation18 + $0x20] sm:$0xff]
          %v1266 = vld [vmem:[#allocation18 + $0x28] sm:$0xff]
          %v1267 = vld [vmem:[#allocation18 + $0x30] sm:$0xff]
          %v1268 = vld [vmem:[#allocation18 + $0x38] sm:$0xff]
          %v1269 = vld [vmem:[#allocation18 + $0x40] sm:$0xff]
          %v1270 = vld [vmem:[#allocation18 + $0x48] sm:$0xff]
          %v1271 = vld [vmem:[#allocation18 + $0x50] sm:$0xff]
          %v1272 = vld [vmem:[#allocation18 + $0x58] sm:$0xff]
          %v1273 = vld [vmem:[#allocation18 + $0x60] sm:$0xff]
          %v1274 = vld [vmem:[#allocation18 + $0x68] sm:$0xff]
          %v1275 = vld [vmem:[#allocation18 + $0x70] sm:$0xff]
          %v1276 = vld [vmem:[#allocation18 + $0x78] sm:$0xff]
          %v1277 = vld [vmem:[%s12] sm:$0x1]
          %v1279 = vperm.slane %v1277, 0
          %1281 = vmatpush.msra.mxu0 %v1276
          %1282 = vmatpush.msra.mxu0 %v1275
          %1283 = vmatpush.msra.mxu0 %v1274
          %1284 = vmatpush.msra.mxu0 %v1273
          %1285 = vmatpush.msra.mxu0 %v1272
          %1286 = vmatpush.msra.mxu0 %v1271
          %1287 = vmatpush.msra.mxu0 %v1270
          %1288 = vmatpush.msra.mxu0 %v1269
          %1289 = vmatpush.msra.mxu0 %v1268
          %1290 = vmatpush.msra.mxu0 %v1267
          %1291 = vmatpush.msra.mxu0 %v1266
          %1292 = vmatpush.msra.mxu0 %v1265
          %1293 = vmatpush.msra.mxu0 %v1264
          %1294 = vmatpush.msra.mxu0 %v1263
          %1295 = vmatpush.msra.mxu0 %v1262
          %1296 = vmatpush.msra.mxu0 %v1261
          %1297 = vmatmul.f32.gmra.mxu0 %v1255
          %v1298 = vpop.f32.mrf.mxu0
          %v1299 = vadd.f32 %v1279, %v1298
          %1300 = vdwg.mxu0
          %1301 = vmax.xlane.f32.xlu0 %v1299
          %v1302 = vpop.xlane.xlu0 %1301
          %v1303 = vsub.f32 %v1299, %v1302
          %v1304 = vmul.f32 %v1303, 1.442695
          %v1305 = vpow.pop %v1304
          %1306 = vadd.xlane.f32.xlu0 %v1305
          %v1307 = vpop.xlane.xlu0 %1306
          %v1308 = vlog2.pop %v1307
          %v1309 = vmul.f32 %v1308, 0.6931472
          %v1310 = vadd.f32 %v1309, %v1302
          %v1311 = vsub.f32 %v1299, %v1310
          %1312 = vst [vmem:[#allocation20] sm:$0xff] %v1311
        $region112: #{tpu_custom_call.1} parent=71 // pred_fallthru
          _
        // Predicated region
        $region113: #{tpu_custom_call.1} parent=71 // pred_check
          %p1313 = pneg %p342
        $region114: #{tpu_custom_call.1} parent=71 // pred_check_branch
          %1315 = sbr.rel (%p1313) target = $region116
        $region115: #{tpu_custom_call.1} parent=71 // pred_region
          %1317 = vsyncadd [#allocation8], 0
          %s1318 = smul.addr %s36, 8
          %s1319 = scalar_lea.hbm %s13, %s1318
          %s1321 = sshll.u32 [#allocation20], 4
          %s1322 = int_to_ptr.vmem [resolvable:$true] %s1321
          %s1323 = sshll.u32 %s1319, 4
          %s1324 = int_to_ptr.hbm [resolvable:$true] %s1323
          %1326 = dma.vmem_to_hbm [thread:$0]  %s1322, 128, %s1324, [#allocation8]
        $region116: #{tpu_custom_call.1} parent=71 // pred_fallthru
          _
        // Predicated region
        $region117: #{tpu_custom_call.1} parent=71 // pred_check
          %p1327 = pneg %p342
        $region118: #{tpu_custom_call.1} parent=71 // pred_check_branch
          %1329 = sbr.rel (%p1327) target = $region120
        $region119: #{tpu_custom_call.1} parent=71 // pred_region
          %1331 = dma.done [#allocation8], 128
        $region120: #{tpu_custom_call.1} parent=71 // pred_fallthru
          _
      $region72: #{tpu_custom_call.1} parent=5 // pred_fallthru
        _
      %p1332 = scmp.le.s32.totalorder 2, %s27
      // Predicated region
      $region121: #{tpu_custom_call.1} parent=5 // pred_check
        %p1333 = pneg %p1332
      $region122: #{tpu_custom_call.1} parent=5 // pred_check_branch
        %1335 = sbr.rel (%p1333) target = $region124
      $region123: #{tpu_custom_call.1} parent=5 // pred_region
        %s1336 = ssub.s32 %s27, 2
      $region124: #{tpu_custom_call.1} parent=5 // pred_fallthru
        _
    $region6: #{tpu_custom_call.1} parent=1 // loop_footer
      %s31 = sadd.s32 1, %s27
    $region7: #{tpu_custom_call.1} parent=1 // loop_footer_branch
      %26 = sbr.rel target = $region3
    $region8: #{tpu_custom_call.1} parent=1 // loop_exit
      _
    %1337 = vsyncpa [#allocation7], 1
    %s1338 = scalar_lea.sflag [#allocation7], 1
    %1339 = vsyncpa %s1338, 1
    %1340 = vsyncpa [#allocation10], 1
    %1341 = vsyncpa [#allocation13], 1
    %1342 = vsyncpa [#allocation16], 1
    %1343 = vsyncpa [#allocation19], 1
    %1344 = vsyncpa [#allocation8], 1
    %s1345 = scalar_lea.sflag [#allocation8], 1
    %1346 = vsyncpa %s1345, 1

</llo_original>
